<compile_context>
chip_gen: v7x
topology: tpu7x:2x2x1
jax: 0.10.0
libtpu: 0.0.40
codegen_flags: <defaults>
</compile_context>

<pallas_src>
import jax
import jax.numpy as jnp
from jax.experimental import pallas as pl
from jax.experimental.pallas import tpu as pltpu

EPS = 1e-5  # nn.LayerNorm default eps


def _round_up(x, m):
    return ((x + m - 1) // m) * m


def _layernorm_relu(x, gamma, beta):
    """Single-pass LayerNorm (sum + sum-of-squares) fused with ReLU, all f32."""
    d = x.shape[-1]
    inv_d = 1.0 / d
    s = jnp.sum(x, axis=-1, keepdims=True)
    ss = jnp.sum(x * x, axis=-1, keepdims=True)
    mu = s * inv_d
    var = jnp.maximum(ss * inv_d - mu * mu, 0.0)
    inv = jax.lax.rsqrt(var + EPS)
    return jnp.maximum((x - mu) * inv * gamma + beta, 0.0)


def fused_mm_kernel(
    text_ref,      # [TB, D]   f32 text embeddings (external text model output)
    num_ref,       # [TB, Nd]  f32 numerical features
    w1_ref,        # [Nd, H]   bf16  Linear(Nd -> H)
    b1_ref,        # [1, H]    f32
    g1_ref, be1_ref,           # LayerNorm(H) gamma/beta, f32
    w2_ref,        # [H, D]    bf16  Linear(H -> D)
    b2_ref,        # [1, D]    f32
    wf_ref,        # [2D, D]   bf16  fusion Linear(2D -> D), rows 0:D = text half
    bf_ref,        # [1, D]    f32
    gf_ref, bef_ref,           # LayerNorm(D) gamma/beta, f32
    out_ref,                   # [TB, D]
):
    D = out_ref.shape[-1]

    # ---- numerical_encoder: Linear -> LayerNorm -> ReLU -> (Dropout=id) -> Linear ----
    h = jnp.dot(num_ref[...].astype(jnp.bfloat16), w1_ref[...],
                preferred_element_type=jnp.float32) + b1_ref[...]
    h = _layernorm_relu(h, g1_ref[...], be1_ref[...])
    num_emb = jnp.dot(h.astype(jnp.bfloat16), w2_ref[...],
                      preferred_element_type=jnp.float32) + b2_ref[...]

    # ---- fusion: Linear(cat([text, num_emb])) == text @ Wf[:D] + num_emb @ Wf[D:] ----
    wft = wf_ref[:D, :]   # static, tile-aligned slices of the resident weight block
    wfn = wf_ref[D:, :]
    fused = (
        jnp.dot(text_ref[...].astype(jnp.bfloat16), wft,
                preferred_element_type=jnp.float32)
        + jnp.dot(num_emb.astype(jnp.bfloat16), wfn,
                  preferred_element_type=jnp.float32)
        + bf_ref[...]
    )
    fused = _layernorm_relu(fused, gf_ref[...], bef_ref[...])
    # Dropout(0.2) -> identity in eval mode
    out_ref[...] = fused.astype(out_ref.dtype)


def _choose_batch_tile(B, batch_tile):
    """Batch tile: multiple of 8 sublanes, <= B (only the trailing block may be
    partial), and aims for >= 2 grid steps so v7x megacore can shard the batch
    axis across both TensorCores."""
    if B <= 8:
        return B                              # single full-extent block
    if B <= 2 * batch_tile:
        tb = _round_up((B + 1) // 2, 8)       # exactly 2 grid steps
    else:
        tb = _round_up(batch_tile, 8)
    return max(8, min(tb, (B // 8) * 8))


def multimodal_forward(text_emb, num_feat, params, *, batch_tile=1024,
                       out_dtype=jnp.float32):
    """Fused Pallas forward.

    text_emb : [B, D]  float32 (precomputed text-encoder output)
    num_feat : [B, Nd] float32
    params   : kernel-ready dict from init_params (bf16 matmul weights,
               fusion weight pre-concatenated; biases / LN params in f32).
    """
    B, D = text_emb.shape
    Nd = num_feat.shape[1]
    H = params["w1"].shape[1]

    TB = _choose_batch_tile(B, batch_tile)

    def row_spec(shape):       # tiled over the batch grid axis
        return pl.BlockSpec(shape, lambda i: (i, 0))

    def const_spec(shape):     # VMEM-resident across all grid steps
        return pl.BlockSpec(shape, lambda i: (0, 0))

    in_specs = [
        row_spec((TB, D)), row_spec((TB, Nd)),
        const_spec((Nd, H)), const_spec((1, H)), const_spec((1, H)), const_spec((1, H)),
        const_spec((H, D)), const_spec((1, D)),
        const_spec((2 * D, D)), const_spec((1, D)), const_spec((1, D)), const_spec((1, D)),
    ]

    return pl.pallas_call(
        fused_mm_kernel,
        out_shape=jax.ShapeDtypeStruct((B, D), out_dtype),
        grid=(pl.cdiv(B, TB),),                # no padding; trailing block clipped
        in_specs=in_specs,
        out_specs=row_spec((TB, D)),
        compiler_params=pltpu.CompilerParams(
            dimension_semantics=("parallel",),     # megacore-shard batch on v7x
            vmem_limit_bytes=32 * 1024 * 1024,     # ~2x working set at TB=1024
        ),
    )(text_emb, num_feat,
      params["w1"], params["b1"], params["g1"], params["be1"],
      params["w2"], params["b2"],
      params["wf"], params["bf"], params["gf"], params["bef"])


def init_params(key, numerical_dim, output_dim):
    """Deterministic synthetic parameters, stored KERNEL-READY (shapes match the
    nn.Module __init__): matmul weights in bf16, fusion halves pre-concatenated
    into one [2D, D] block, biases / LN params in f32. Done once here so the
    per-call wrapper performs no concat / astype HBM passes."""
    D, Nd, H = output_dim, numerical_dim, output_dim // 2
    ks = jax.random.split(key, 3)

    def lin(k, fan_in, fan_out):
        bound = 1.0 / (fan_in ** 0.5)
        kw, kb = jax.random.split(k)
        w = jax.random.uniform(kw, (fan_in, fan_out), jnp.float32, -bound, bound)
        b = jax.random.uniform(kb, (1, fan_out), jnp.float32, -bound, bound)
        return w, b

    w1, b1 = lin(ks[0], Nd, H)
    w2, b2 = lin(ks[1], H, D)
    wf, bf = lin(ks[2], 2 * D, D)
    return {
        "w1": w1.astype(jnp.bfloat16), "b1": b1,
        "g1": jnp.ones((1, H), jnp.float32), "be1": jnp.zeros((1, H), jnp.float32),
        "w2": w2.astype(jnp.bfloat16), "b2": b2,
        "wf": wf.astype(jnp.bfloat16), "bf": bf,
        "gf": jnp.ones((1, D), jnp.float32), "bef": jnp.zeros((1, D), jnp.float32),
    }


def reference_forward(text_emb, num_feat, p, *, matmul_dtype=jnp.float32):
    """Pure-JAX reference mirroring the PyTorch module (eval mode).

    matmul_dtype=jnp.bfloat16 replicates the kernel's MXU-input precision
    (f32 accumulation) for a tight comparison.
    """
    D = p["gf"].shape[-1]

    def ln(x, g, b):
        mu = x.mean(-1, keepdims=True)
        var = ((x - mu) ** 2).mean(-1, keepdims=True)
        return (x - mu) / jnp.sqrt(var + EPS) * g + b

    def mm(a, w):
        return jnp.dot(a.astype(matmul_dtype), w.astype(matmul_dtype),
                       preferred_element_type=jnp.float32)

    h = mm(num_feat, p["w1"]) + p["b1"]
    h = jnp.maximum(ln(h, p["g1"], p["be1"]), 0.0)
    n = mm(h, p["w2"]) + p["b2"]
    f = mm(text_emb, p["wf"][:D]) + mm(n, p["wf"][D:]) + p["bf"]
    return jnp.maximum(ln(f, p["gf"], p["bef"]), 0.0)


if __name__ == "__main__":
    B, Nd, D = 8, 16, 384  # batch, numerical_dim, output_dim (module defaults)
    key = jax.random.PRNGKey(0)
    k_txt, k_num, k_par = jax.random.split(key, 3)

    # TODO(synk): tokenization + pretrained FinBERT/LLM text encoder has no Pallas
    # equivalent; text embeddings are synthesized here (matches test_mode behaviour).
    text_emb = jax.random.normal(k_txt, (B, D), jnp.float32)
    num_feat = jax.random.normal(k_num, (B, Nd), jnp.float32)
    params = init_params(k_par, Nd, D)

    out = jax.block_until_ready(multimodal_forward(text_emb, num_feat, params))
    assert out.shape == (B, D)

    # Tight check against a reference matching the kernel's bf16-MXU / f32-acc math.
    ref_bf16 = reference_forward(text_emb, num_feat, params, matmul_dtype=jnp.bfloat16)
    assert jnp.allclose(out, ref_bf16, atol=1e-2, rtol=1e-2), "mismatch vs bf16-matched reference"

    # Loose semantic sanity check against full-f32 (PyTorch-equivalent) matmul math.
    ref_f32 = reference_forward(text_emb, num_feat, params, matmul_dtype=jnp.float32)
    assert jnp.allclose(out, ref_f32, atol=7e-2, rtol=7e-2), "mismatch vs f32 reference"

    # Exercise the padding-free path: 2 grid steps + a partial trailing block.
    B2 = 20
    text2 = jax.random.normal(jax.random.PRNGKey(1), (B2, D), jnp.float32)
    num2 = jax.random.normal(jax.random.PRNGKey(2), (B2, Nd), jnp.float32)
    out2 = jax.block_until_ready(multimodal_forward(text2, num2, params))
    assert out2.shape == (B2, D)
    ref2 = reference_forward(text2, num2, params, matmul_dtype=jnp.bfloat16)
    assert jnp.allclose(out2, ref2, atol=1e-2, rtol=1e-2), "mismatch on partial-block case"

    print("KERNEL_OK")
</pallas_src>

<mosaic_0001>
module attributes {stable_mosaic.version = 11 : i64} {
  func.func @fused_mm_kernel(%arg0: i32, %arg1: memref<8x384xf32, #tpu.memory_space<vmem>>, %arg2: memref<8x16xf32, #tpu.memory_space<vmem>>, %arg3: memref<16x192xbf16, #tpu.memory_space<vmem>>, %arg4: memref<1x192xf32, #tpu.memory_space<vmem>>, %arg5: memref<1x192xf32, #tpu.memory_space<vmem>>, %arg6: memref<1x192xf32, #tpu.memory_space<vmem>>, %arg7: memref<192x384xbf16, #tpu.memory_space<vmem>>, %arg8: memref<1x384xf32, #tpu.memory_space<vmem>>, %arg9: memref<768x384xbf16, #tpu.memory_space<vmem>>, %arg10: memref<1x384xf32, #tpu.memory_space<vmem>>, %arg11: memref<1x384xf32, #tpu.memory_space<vmem>>, %arg12: memref<1x384xf32, #tpu.memory_space<vmem>>, %arg13: memref<8x384xf32, #tpu.memory_space<vmem>>) attributes {dimension_semantics = [#tpu.dimension_semantics<parallel>], iteration_bounds = array<i64: 1>, scalar_prefetch = 0 : i64, scratch_operands = 0 : i64, tpu.core_type = #tpu.core_type<tc>, window_params = [{transform_indices = @transform_0, window_bounds = array<i64: 8, 384>}, {transform_indices = @transform_1, window_bounds = array<i64: 8, 16>}, {pipeline_mode = #tpu.pipeline_mode<synchronous>, transform_indices = @transform_2, window_bounds = array<i64: 16, 192>}, {pipeline_mode = #tpu.pipeline_mode<synchronous>, transform_indices = @transform_3, window_bounds = array<i64: 1, 192>}, {pipeline_mode = #tpu.pipeline_mode<synchronous>, transform_indices = @transform_4, window_bounds = array<i64: 1, 192>}, {pipeline_mode = #tpu.pipeline_mode<synchronous>, transform_indices = @transform_5, window_bounds = array<i64: 1, 192>}, {pipeline_mode = #tpu.pipeline_mode<synchronous>, transform_indices = @transform_6, window_bounds = array<i64: 192, 384>}, {pipeline_mode = #tpu.pipeline_mode<synchronous>, transform_indices = @transform_7, window_bounds = array<i64: 1, 384>}, {pipeline_mode = #tpu.pipeline_mode<synchronous>, transform_indices = @transform_8, window_bounds = array<i64: 768, 384>}, {pipeline_mode = #tpu.pipeline_mode<synchronous>, transform_indices = @transform_9, window_bounds = array<i64: 1, 384>}, {pipeline_mode = #tpu.pipeline_mode<synchronous>, transform_indices = @transform_10, window_bounds = array<i64: 1, 384>}, {pipeline_mode = #tpu.pipeline_mode<synchronous>, transform_indices = @transform_11, window_bounds = array<i64: 1, 384>}, {transform_indices = @transform_12, window_bounds = array<i64: 8, 384>}]} {
    %c0 = arith.constant 0 : index
    %c0_0 = arith.constant 0 : index
    %0 = vector.load %arg2[%c0, %c0_0] : memref<8x16xf32, #tpu.memory_space<vmem>>, vector<8x16xf32>
    %1 = arith.truncf %0 : vector<8x16xf32> to vector<8x16xbf16>
    %c0_1 = arith.constant 0 : index
    %c0_2 = arith.constant 0 : index
    %2 = vector.load %arg3[%c0_1, %c0_2] : memref<16x192xbf16, #tpu.memory_space<vmem>>, vector<16x192xbf16>
    %cst = arith.constant dense<0.000000e+00> : vector<8x192xf32>
    %3 = tpu.matmul %1, %2, %cst {dimension_numbers = #tpu.dot_dimension_numbers<[1], [0], [0], [1], [0, 0, 1, 1], [], []>} : vector<8x16xbf16>, vector<16x192xbf16>, vector<8x192xf32> -> vector<8x192xf32>
    %c0_3 = arith.constant 0 : index
    %c0_4 = arith.constant 0 : index
    %4 = vector.load %arg4[%c0_3, %c0_4] : memref<1x192xf32, #tpu.memory_space<vmem>>, vector<1x192xf32>
    %5 = vector.broadcast %4 : vector<1x192xf32> to vector<8x192xf32>
    %6 = arith.addf %3, %5 : vector<8x192xf32>
    %c0_5 = arith.constant 0 : index
    %c0_6 = arith.constant 0 : index
    %7 = vector.load %arg5[%c0_5, %c0_6] : memref<1x192xf32, #tpu.memory_space<vmem>>, vector<1x192xf32>
    %c0_7 = arith.constant 0 : index
    %c0_8 = arith.constant 0 : index
    %8 = vector.load %arg6[%c0_7, %c0_8] : memref<1x192xf32, #tpu.memory_space<vmem>>, vector<1x192xf32>
    %cst_9 = arith.constant dense<0.000000e+00> : vector<8xf32>
    %9 = vector.multi_reduction <add>, %6, %cst_9 [1] : vector<8x192xf32> to vector<8xf32>
    %10 = vector.shape_cast %9 : vector<8xf32> to vector<8x1xf32>
    %11 = arith.mulf %6, %6 : vector<8x192xf32>
    %cst_10 = arith.constant dense<0.000000e+00> : vector<8xf32>
    %12 = vector.multi_reduction <add>, %11, %cst_10 [1] : vector<8x192xf32> to vector<8xf32>
    %13 = vector.shape_cast %12 : vector<8xf32> to vector<8x1xf32>
    %cst_11 = arith.constant 0.00520833349 : f32
    %14 = vector.broadcast %cst_11 : f32 to vector<8x1xf32>
    %15 = arith.mulf %10, %14 : vector<8x1xf32>
    %cst_12 = arith.constant 0.00520833349 : f32
    %16 = vector.broadcast %cst_12 : f32 to vector<8x1xf32>
    %17 = arith.mulf %13, %16 : vector<8x1xf32>
    %18 = arith.mulf %15, %15 : vector<8x1xf32>
    %19 = arith.subf %17, %18 : vector<8x1xf32>
    %cst_13 = arith.constant 0.000000e+00 : f32
    %20 = vector.broadcast %cst_13 : f32 to vector<8x1xf32>
    %21 = arith.maximumf %19, %20 : vector<8x1xf32>
    %cst_14 = arith.constant 9.99999974E-6 : f32
    %22 = vector.broadcast %cst_14 : f32 to vector<8x1xf32>
    %23 = arith.addf %21, %22 : vector<8x1xf32>
    %24 = math.rsqrt %23 : vector<8x1xf32>
    %25 = vector.broadcast %15 : vector<8x1xf32> to vector<8x192xf32>
    %26 = arith.subf %6, %25 : vector<8x192xf32>
    %27 = vector.broadcast %24 : vector<8x1xf32> to vector<8x192xf32>
    %28 = arith.mulf %26, %27 : vector<8x192xf32>
    %29 = vector.broadcast %7 : vector<1x192xf32> to vector<8x192xf32>
    %30 = arith.mulf %28, %29 : vector<8x192xf32>
    %31 = vector.broadcast %8 : vector<1x192xf32> to vector<8x192xf32>
    %32 = arith.addf %30, %31 : vector<8x192xf32>
    %cst_15 = arith.constant 0.000000e+00 : f32
    %33 = vector.broadcast %cst_15 : f32 to vector<8x192xf32>
    %34 = arith.maximumf %32, %33 : vector<8x192xf32>
    %35 = arith.truncf %34 : vector<8x192xf32> to vector<8x192xbf16>
    %c0_16 = arith.constant 0 : index
    %c0_17 = arith.constant 0 : index
    %36 = vector.load %arg7[%c0_16, %c0_17] : memref<192x384xbf16, #tpu.memory_space<vmem>>, vector<192x384xbf16>
    %cst_18 = arith.constant dense<0.000000e+00> : vector<8x384xf32>
    %37 = tpu.matmul %35, %36, %cst_18 {dimension_numbers = #tpu.dot_dimension_numbers<[1], [0], [0], [1], [0, 0, 1, 1], [], []>} : vector<8x192xbf16>, vector<192x384xbf16>, vector<8x384xf32> -> vector<8x384xf32>
    %c0_19 = arith.constant 0 : index
    %c0_20 = arith.constant 0 : index
    %38 = vector.load %arg8[%c0_19, %c0_20] : memref<1x384xf32, #tpu.memory_space<vmem>>, vector<1x384xf32>
    %39 = vector.broadcast %38 : vector<1x384xf32> to vector<8x384xf32>
    %40 = arith.addf %37, %39 : vector<8x384xf32>
    %c0_21 = arith.constant 0 : index
    %c0_22 = arith.constant 0 : index
    %41 = vector.load %arg9[%c0_21, %c0_22] : memref<768x384xbf16, #tpu.memory_space<vmem>>, vector<384x384xbf16>
    %c384 = arith.constant 384 : index
    %c0_23 = arith.constant 0 : index
    %42 = vector.load %arg9[%c384, %c0_23] : memref<768x384xbf16, #tpu.memory_space<vmem>>, vector<384x384xbf16>
    %c0_24 = arith.constant 0 : index
    %c0_25 = arith.constant 0 : index
    %43 = vector.load %arg1[%c0_24, %c0_25] : memref<8x384xf32, #tpu.memory_space<vmem>>, vector<8x384xf32>
    %44 = arith.truncf %43 : vector<8x384xf32> to vector<8x384xbf16>
    %cst_26 = arith.constant dense<0.000000e+00> : vector<8x384xf32>
    %45 = tpu.matmul %44, %41, %cst_26 {dimension_numbers = #tpu.dot_dimension_numbers<[1], [0], [0], [1], [0, 0, 1, 1], [], []>} : vector<8x384xbf16>, vector<384x384xbf16>, vector<8x384xf32> -> vector<8x384xf32>
    %46 = arith.truncf %40 : vector<8x384xf32> to vector<8x384xbf16>
    %cst_27 = arith.constant dense<0.000000e+00> : vector<8x384xf32>
    %47 = tpu.matmul %46, %42, %cst_27 {dimension_numbers = #tpu.dot_dimension_numbers<[1], [0], [0], [1], [0, 0, 1, 1], [], []>} : vector<8x384xbf16>, vector<384x384xbf16>, vector<8x384xf32> -> vector<8x384xf32>
    %48 = arith.addf %45, %47 : vector<8x384xf32>
    %c0_28 = arith.constant 0 : index
    %c0_29 = arith.constant 0 : index
    %49 = vector.load %arg10[%c0_28, %c0_29] : memref<1x384xf32, #tpu.memory_space<vmem>>, vector<1x384xf32>
    %50 = vector.broadcast %49 : vector<1x384xf32> to vector<8x384xf32>
    %51 = arith.addf %48, %50 : vector<8x384xf32>
    %c0_30 = arith.constant 0 : index
    %c0_31 = arith.constant 0 : index
    %52 = vector.load %arg11[%c0_30, %c0_31] : memref<1x384xf32, #tpu.memory_space<vmem>>, vector<1x384xf32>
    %c0_32 = arith.constant 0 : index
    %c0_33 = arith.constant 0 : index
    %53 = vector.load %arg12[%c0_32, %c0_33] : memref<1x384xf32, #tpu.memory_space<vmem>>, vector<1x384xf32>
    %cst_34 = arith.constant dense<0.000000e+00> : vector<8xf32>
    %54 = vector.multi_reduction <add>, %51, %cst_34 [1] : vector<8x384xf32> to vector<8xf32>
    %55 = vector.shape_cast %54 : vector<8xf32> to vector<8x1xf32>
    %56 = arith.mulf %51, %51 : vector<8x384xf32>
    %cst_35 = arith.constant dense<0.000000e+00> : vector<8xf32>
    %57 = vector.multi_reduction <add>, %56, %cst_35 [1] : vector<8x384xf32> to vector<8xf32>
    %58 = vector.shape_cast %57 : vector<8xf32> to vector<8x1xf32>
    %cst_36 = arith.constant 0.00260416674 : f32
    %59 = vector.broadcast %cst_36 : f32 to vector<8x1xf32>
    %60 = arith.mulf %55, %59 : vector<8x1xf32>
    %cst_37 = arith.constant 0.00260416674 : f32
    %61 = vector.broadcast %cst_37 : f32 to vector<8x1xf32>
    %62 = arith.mulf %58, %61 : vector<8x1xf32>
    %63 = arith.mulf %60, %60 : vector<8x1xf32>
    %64 = arith.subf %62, %63 : vector<8x1xf32>
    %cst_38 = arith.constant 0.000000e+00 : f32
    %65 = vector.broadcast %cst_38 : f32 to vector<8x1xf32>
    %66 = arith.maximumf %64, %65 : vector<8x1xf32>
    %cst_39 = arith.constant 9.99999974E-6 : f32
    %67 = vector.broadcast %cst_39 : f32 to vector<8x1xf32>
    %68 = arith.addf %66, %67 : vector<8x1xf32>
    %69 = math.rsqrt %68 : vector<8x1xf32>
    %70 = vector.broadcast %60 : vector<8x1xf32> to vector<8x384xf32>
    %71 = arith.subf %51, %70 : vector<8x384xf32>
    %72 = vector.broadcast %69 : vector<8x1xf32> to vector<8x384xf32>
    %73 = arith.mulf %71, %72 : vector<8x384xf32>
    %74 = vector.broadcast %52 : vector<1x384xf32> to vector<8x384xf32>
    %75 = arith.mulf %73, %74 : vector<8x384xf32>
    %76 = vector.broadcast %53 : vector<1x384xf32> to vector<8x384xf32>
    %77 = arith.addf %75, %76 : vector<8x384xf32>
    %cst_40 = arith.constant 0.000000e+00 : f32
    %78 = vector.broadcast %cst_40 : f32 to vector<8x384xf32>
    %79 = arith.maximumf %77, %78 : vector<8x384xf32>
    %c0_41 = arith.constant 0 : index
    %c0_42 = arith.constant 0 : index
    %80 = vector.load %arg13[%c0_41, %c0_42] : memref<8x384xf32, #tpu.memory_space<vmem>>, vector<8x384xf32>
    tpu.vector_store %arg13[%c0_41, %c0_42], %79 {strides = array<i32>} : memref<8x384xf32, #tpu.memory_space<vmem>>, vector<8x384xf32>,
    return
  }
  func.func @transform_0(%arg0: i32) -> (i32, i32) {
    %c0_i32 = arith.constant 0 : i32
    %c0_i32_0 = arith.constant 0 : i32
    return %arg0, %c0_i32 : i32, i32
  }
  func.func @transform_1(%arg0: i32) -> (i32, i32) {
    %c0_i32 = arith.constant 0 : i32
    %c0_i32_0 = arith.constant 0 : i32
    return %arg0, %c0_i32 : i32, i32
  }
  func.func @transform_2(%arg0: i32) -> (i32, i32) {
    %c0_i32 = arith.constant 0 : i32
    %c0_i32_0 = arith.constant 0 : i32
    %c0_i32_1 = arith.constant 0 : i32
    return %c0_i32, %c0_i32_0 : i32, i32
  }
  func.func @transform_3(%arg0: i32) -> (i32, i32) {
    %c0_i32 = arith.constant 0 : i32
    %c0_i32_0 = arith.constant 0 : i32
    %c0_i32_1 = arith.constant 0 : i32
    return %c0_i32, %c0_i32_0 : i32, i32
  }
  func.func @transform_4(%arg0: i32) -> (i32, i32) {
    %c0_i32 = arith.constant 0 : i32
    %c0_i32_0 = arith.constant 0 : i32
    %c0_i32_1 = arith.constant 0 : i32
    return %c0_i32, %c0_i32_0 : i32, i32
  }
  func.func @transform_5(%arg0: i32) -> (i32, i32) {
    %c0_i32 = arith.constant 0 : i32
    %c0_i32_0 = arith.constant 0 : i32
    %c0_i32_1 = arith.constant 0 : i32
    return %c0_i32, %c0_i32_0 : i32, i32
  }
  func.func @transform_6(%arg0: i32) -> (i32, i32) {
    %c0_i32 = arith.constant 0 : i32
    %c0_i32_0 = arith.constant 0 : i32
    %c0_i32_1 = arith.constant 0 : i32
    return %c0_i32, %c0_i32_0 : i32, i32
  }
  func.func @transform_7(%arg0: i32) -> (i32, i32) {
    %c0_i32 = arith.constant 0 : i32
    %c0_i32_0 = arith.constant 0 : i32
    %c0_i32_1 = arith.constant 0 : i32
    return %c0_i32, %c0_i32_0 : i32, i32
  }
  func.func @transform_8(%arg0: i32) -> (i32, i32) {
    %c0_i32 = arith.constant 0 : i32
    %c0_i32_0 = arith.constant 0 : i32
    %c0_i32_1 = arith.constant 0 : i32
    return %c0_i32, %c0_i32_0 : i32, i32
  }
  func.func @transform_9(%arg0: i32) -> (i32, i32) {
    %c0_i32 = arith.constant 0 : i32
    %c0_i32_0 = arith.constant 0 : i32
    %c0_i32_1 = arith.constant 0 : i32
    return %c0_i32, %c0_i32_0 : i32, i32
  }
  func.func @transform_10(%arg0: i32) -> (i32, i32) {
    %c0_i32 = arith.constant 0 : i32
    %c0_i32_0 = arith.constant 0 : i32
    %c0_i32_1 = arith.constant 0 : i32
    return %c0_i32, %c0_i32_0 : i32, i32
  }
  func.func @transform_11(%arg0: i32) -> (i32, i32) {
    %c0_i32 = arith.constant 0 : i32
    %c0_i32_0 = arith.constant 0 : i32
    %c0_i32_1 = arith.constant 0 : i32
    return %c0_i32, %c0_i32_0 : i32, i32
  }
  func.func @transform_12(%arg0: i32) -> (i32, i32) {
    %c0_i32 = arith.constant 0 : i32
    %c0_i32_0 = arith.constant 0 : i32
    return %arg0, %c0_i32 : i32, i32
  }
}

</mosaic_0001>

<llo_original>
// kernel: tpu_custom_call.1
$region0: #{tpu_custom_call.1}
  #allocation0 [shape = 'u32[]', space=smem, size = 0x4, offset = 0x4, fixed_abs, tag = 'smem constant byte address 0x4 - core index']
  #allocation1 [shape = 'u32[144,128]{1,0:T(1,128)}', space=vmem, size = 0x12000, scoped, tag = 'internal scratch']
  %s0 = inlined_call_operand.hbm [shape: f32[8,384], index: 0, kind: input, shape index: {}]
  %s1 = inlined_call_operand.hbm [shape: f32[8,16], index: 1, kind: input, shape index: {}]
  %s2 = inlined_call_operand.hbm [shape: bf16[16,192], index: 2, kind: input, shape index: {}]
  %s3 = inlined_call_operand.vmem [shape: f32[1,192], index: 3, kind: input, shape index: {}]
  %s4 = inlined_call_operand.hbm [shape: f32[1,192], index: 4, kind: input, shape index: {}]
  %s5 = inlined_call_operand.vmem [shape: f32[1,192], index: 5, kind: input, shape index: {}]
  %s6 = inlined_call_operand.hbm [shape: bf16[192,384], index: 6, kind: input, shape index: {}]
  %s7 = inlined_call_operand.vmem [shape: f32[1,384], index: 7, kind: input, shape index: {}]
  %s8 = inlined_call_operand.hbm [shape: bf16[768,384], index: 8, kind: input, shape index: {}]
  %s9 = inlined_call_operand.vmem [shape: f32[1,384], index: 9, kind: input, shape index: {}]
  %s10 = inlined_call_operand.vmem [shape: f32[1,384], index: 10, kind: input, shape index: {}]
  %s11 = inlined_call_operand.vmem [shape: f32[1,384], index: 11, kind: input, shape index: {}]
  %s12 = inlined_call_operand.hbm [shape: f32[8,384], index: 12, kind: output, shape index: {}]
  %s13 = sld [smem:[#allocation0]]
  $region82: #{tpu_custom_call.1} parent=0
    _
  %s15 = ssub.s32 1, %s13
  %s16 = scalar_select 0, %s15, %s13
  $region1: #{tpu_custom_call.1} parent=0
    #allocation2 [shape = 'u8[12288]{0}', space=vmem, size = 0x3000, scoped, tag = 'input window, operand 0, single buffered']
    #allocation3 [shape = 's32[1]{0}', space=sflag, size = 0x4, scoped, tag = 'scoped memory for tpu_custom_call.1']
    #allocation4 [shape = 's32[1]{0}', space=sflag, size = 0x4, scoped, tag = 'scoped memory for tpu_custom_call.1']
    #allocation5 [shape = 'u8[4096]{0}', space=vmem, size = 0x1000, scoped, tag = 'input window, operand 1, single buffered']
    #allocation6 [shape = 's32[1]{0}', space=sflag, size = 0x4, scoped, tag = 'scoped memory for tpu_custom_call.1']
    #allocation7 [shape = 'u8[8192]{0}', space=vmem, size = 0x2000, scoped, tag = 'input window, operand 2, single buffered']
    #allocation8 [shape = 'u8[1024]{0}', space=vmem, size = 0x400, scoped, tag = 'input window, operand 4, single buffered']
    #allocation9 [shape = 's32[1]{0}', space=sflag, size = 0x4, scoped, tag = 'scoped memory for tpu_custom_call.1']
    #allocation10 [shape = 'u8[147456]{0}', space=vmem, size = 0x24000, scoped, tag = 'input window, operand 6, single buffered']
    #allocation11 [shape = 'u8[589824]{0}', space=vmem, size = 0x90000, scoped, tag = 'input window, operand 8, single buffered']
    #allocation12 [shape = 's32[1]{0}', space=sflag, size = 0x4, scoped, tag = 'scoped memory for tpu_custom_call.1']
    #allocation13 [shape = 'u8[12288]{0}', space=vmem, size = 0x3000, scoped, tag = 'output window, operand 0, single buffered']
    %17 = vsyncpa [#allocation3], 0
    %18 = vsyncpa [#allocation6], 0
    %19 = vsyncpa [#allocation9], 0
    %20 = vsyncpa [#allocation12], 0
    %21 = vsyncpa [#allocation4], 0
    // Predicated region
    $region2: #{tpu_custom_call.1} parent=1 // pred_check
      _
    $region3: #{tpu_custom_call.1} parent=1 // pred_check_branch
      %23 = sbr.rel (0) target = $region5
    $region4: #{tpu_custom_call.1} parent=1 // pred_region
      %s25 = ssub.s32 384, 384
      %26 = vsyncadd [#allocation3], %s25
      %s28 = sshll.u32 [#allocation2], 4
      %s29 = int_to_ptr.vmem [resolvable:$true] %s28
      %31 = dma.hbm_to_vmem [thread:$0]  %s0, 384, %s29, [#allocation3]
    $region5: #{tpu_custom_call.1} parent=1 // pred_fallthru
      _
    // Predicated region
    $region6: #{tpu_custom_call.1} parent=1 // pred_check
      _
    $region7: #{tpu_custom_call.1} parent=1 // pred_check_branch
      %33 = sbr.rel (0) target = $region9
    $region8: #{tpu_custom_call.1} parent=1 // pred_region
      %s35 = ssub.s32 128, 128
      %36 = vsyncadd [#allocation6], %s35
      %s38 = sshll.u32 [#allocation5], 4
      %s39 = int_to_ptr.vmem [resolvable:$true] %s38
      %41 = dma.hbm_to_vmem [thread:$0]  %s1, 128, %s39, [#allocation6]
    $region9: #{tpu_custom_call.1} parent=1 // pred_fallthru
      _
    // Predicated region
    $region10: #{tpu_custom_call.1} parent=1 // pred_check
      _
    $region11: #{tpu_custom_call.1} parent=1 // pred_check_branch
      %43 = sbr.rel (0) target = $region13
    $region12: #{tpu_custom_call.1} parent=1 // pred_region
      %s45 = ssub.s32 256, 256
      %46 = vsyncadd [#allocation6], %s45
      %s47 = sshll.u32 [#allocation7], 4
      %s48 = int_to_ptr.vmem [resolvable:$true] %s47
      %53 = dma.hbm_to_vmem [thread:$0]  %s2, 256, %s48, [#allocation6], 128, 128, 8
    $region13: #{tpu_custom_call.1} parent=1 // pred_fallthru
      _
    // Predicated region
    $region14: #{tpu_custom_call.1} parent=1 // pred_check
      _
    $region15: #{tpu_custom_call.1} parent=1 // pred_check_branch
      %55 = sbr.rel (0) target = $region17
    $region16: #{tpu_custom_call.1} parent=1 // pred_region
      _
    $region17: #{tpu_custom_call.1} parent=1 // pred_fallthru
      _
    // Predicated region
    $region18: #{tpu_custom_call.1} parent=1 // pred_check
      _
    $region19: #{tpu_custom_call.1} parent=1 // pred_check_branch
      %57 = sbr.rel (0) target = $region21
    $region20: #{tpu_custom_call.1} parent=1 // pred_region
      %s59 = ssub.s32 32, 32
      %60 = vsyncadd [#allocation9], %s59
      %s62 = sshll.u32 [#allocation8], 4
      %s63 = int_to_ptr.vmem [resolvable:$true] %s62
      %65 = dma.hbm_to_vmem [thread:$0]  %s4, 32, %s63, [#allocation9]
    $region21: #{tpu_custom_call.1} parent=1 // pred_fallthru
      _
    // Predicated region
    $region22: #{tpu_custom_call.1} parent=1 // pred_check
      _
    $region23: #{tpu_custom_call.1} parent=1 // pred_check_branch
      %67 = sbr.rel (0) target = $region25
    $region24: #{tpu_custom_call.1} parent=1 // pred_region
      _
    $region25: #{tpu_custom_call.1} parent=1 // pred_fallthru
      _
    // Predicated region
    $region26: #{tpu_custom_call.1} parent=1 // pred_check
      _
    $region27: #{tpu_custom_call.1} parent=1 // pred_check_branch
      %69 = sbr.rel (0) target = $region29
    $region28: #{tpu_custom_call.1} parent=1 // pred_region
      %s71 = ssub.s32 4608, 4608
      %72 = vsyncadd [#allocation9], %s71
      %s73 = sshll.u32 [#allocation10], 4
      %s74 = int_to_ptr.vmem [resolvable:$true] %s73
      %79 = dma.hbm_to_vmem [thread:$0]  %s6, 4608, %s74, [#allocation9], 192, 192, 12
    $region29: #{tpu_custom_call.1} parent=1 // pred_fallthru
      _
    // Predicated region
    $region30: #{tpu_custom_call.1} parent=1 // pred_check
      _
    $region31: #{tpu_custom_call.1} parent=1 // pred_check_branch
      %81 = sbr.rel (0) target = $region33
    $region32: #{tpu_custom_call.1} parent=1 // pred_region
      _
    $region33: #{tpu_custom_call.1} parent=1 // pred_fallthru
      _
    // Predicated region
    $region34: #{tpu_custom_call.1} parent=1 // pred_check
      _
    $region35: #{tpu_custom_call.1} parent=1 // pred_check_branch
      %83 = sbr.rel (0) target = $region37
    $region36: #{tpu_custom_call.1} parent=1 // pred_region
      %s85 = ssub.s32 18432, 18432
      %86 = vsyncadd [#allocation12], %s85
      %s87 = sshll.u32 [#allocation11], 4
      %s88 = int_to_ptr.vmem [resolvable:$true] %s87
      %93 = dma.hbm_to_vmem [thread:$0]  %s8, 18432, %s88, [#allocation12], 192, 192, 12
    $region37: #{tpu_custom_call.1} parent=1 // pred_fallthru
      _
    // Predicated region
    $region38: #{tpu_custom_call.1} parent=1 // pred_check
      _
    $region39: #{tpu_custom_call.1} parent=1 // pred_check_branch
      %95 = sbr.rel (0) target = $region41
    $region40: #{tpu_custom_call.1} parent=1 // pred_region
      _
    $region41: #{tpu_custom_call.1} parent=1 // pred_fallthru
      _
    // Predicated region
    $region42: #{tpu_custom_call.1} parent=1 // pred_check
      _
    $region43: #{tpu_custom_call.1} parent=1 // pred_check_branch
      %97 = sbr.rel (0) target = $region45
    $region44: #{tpu_custom_call.1} parent=1 // pred_region
      _
    $region45: #{tpu_custom_call.1} parent=1 // pred_fallthru
      _
    // Predicated region
    $region46: #{tpu_custom_call.1} parent=1 // pred_check
      _
    $region47: #{tpu_custom_call.1} parent=1 // pred_check_branch
      %99 = sbr.rel (0) target = $region49
    $region48: #{tpu_custom_call.1} parent=1 // pred_region
      _
    $region49: #{tpu_custom_call.1} parent=1 // pred_fallthru
      _
    // Predicated region
    $region50: #{tpu_custom_call.1} parent=1 // pred_check
      _
    $region51: #{tpu_custom_call.1} parent=1 // pred_check_branch
      %101 = sbr.rel (0) target = $region53
    $region52: #{tpu_custom_call.1} parent=1 // pred_region
      %102 = dma.done [#allocation3], 384
    $region53: #{tpu_custom_call.1} parent=1 // pred_fallthru
      _
    // Predicated region
    $region54: #{tpu_custom_call.1} parent=1 // pred_check
      _
    $region55: #{tpu_custom_call.1} parent=1 // pred_check_branch
      %104 = sbr.rel (0) target = $region57
    $region56: #{tpu_custom_call.1} parent=1 // pred_region
      %105 = dma.done [#allocation6], 128
    $region57: #{tpu_custom_call.1} parent=1 // pred_fallthru
      _
    // Predicated region
    $region58: #{tpu_custom_call.1} parent=1 // pred_check
      _
    $region59: #{tpu_custom_call.1} parent=1 // pred_check_branch
      %107 = sbr.rel (0) target = $region61
    $region60: #{tpu_custom_call.1} parent=1 // pred_region
      %108 = dma.done [#allocation6], 256
    $region61: #{tpu_custom_call.1} parent=1 // pred_fallthru
      _
    // Predicated region
    $region62: #{tpu_custom_call.1} parent=1 // pred_check
      _
    $region63: #{tpu_custom_call.1} parent=1 // pred_check_branch
      %110 = sbr.rel (0) target = $region65
    $region64: #{tpu_custom_call.1} parent=1 // pred_region
      %111 = dma.done [#allocation9], 32
    $region65: #{tpu_custom_call.1} parent=1 // pred_fallthru
      _
    // Predicated region
    $region66: #{tpu_custom_call.1} parent=1 // pred_check
      _
    $region67: #{tpu_custom_call.1} parent=1 // pred_check_branch
      %113 = sbr.rel (0) target = $region69
    $region68: #{tpu_custom_call.1} parent=1 // pred_region
      %114 = dma.done [#allocation9], 4608
    $region69: #{tpu_custom_call.1} parent=1 // pred_fallthru
      _
    // Predicated region
    $region70: #{tpu_custom_call.1} parent=1 // pred_check
      _
    $region71: #{tpu_custom_call.1} parent=1 // pred_check_branch
      %116 = sbr.rel (0) target = $region73
    $region72: #{tpu_custom_call.1} parent=1 // pred_region
      %117 = dma.done [#allocation12], 18432
    $region73: #{tpu_custom_call.1} parent=1 // pred_fallthru
      _
    %v119 = vld [vmem:[#allocation5] sm:$0xff]
    %v120 = vpack.c.bf16 %v119, %v119
    %v121 = vld [vmem:[#allocation7] sm:$0xff]
    %v122 = vld [vmem:[#allocation7 + $0x8] sm:$0xff]
    %v123 = vld [vmem:[%s3] sm:$0x3]
    %v125 = vlaneseq
    %v126 = vshrl.u32 %v125, 7
    %v127 = vsub.s32 0, %v126
    %v128 = vrot.slane %v123, %v127
    %v129 = vlaneseq
    %v130 = vshrl.u32 %v129, 7
    %v131 = vsub.s32 1, %v130
    %v132 = vrot.slane %v123, %v131
    %v137 = vunpack.c.l.b16 %v121
    %v138 = vunpack.c.h.b16 %v121
    %v139 = vunpack.c.l.b16 %v122
    %v140 = vunpack.c.h.b16 %v122
    %v141 = vpack.c.b16 %v139, %v137
    %v142 = vpack.c.b16 %v140, %v138
    %vm145 = vcmask 130048
    %v147 = vsel %vm145, %v120, 0
    %149 = vmatprep.subr.bf16.mxu0 %v142
    %150 = vmatpush1.bf16.msra.mxu0 %v141
    %151 = vmatprep.subr.bf16.mxu0 0
    %152 = vmatpush1.bf16.msra.mxu0 0
    %153 = vmatprep.subr.bf16.mxu0 0
    %154 = vmatpush1.bf16.msra.mxu0 0
    %155 = vmatprep.subr.bf16.mxu0 0
    %156 = vmatpush1.bf16.msra.mxu0 0
    %157 = vmatprep.subr.bf16.mxu0 0
    %158 = vmatpush1.bf16.msra.mxu0 0
    %159 = vmatprep.subr.bf16.mxu0 0
    %160 = vmatpush1.bf16.msra.mxu0 0
    %161 = vmatprep.subr.bf16.mxu0 0
    %162 = vmatpush1.bf16.msra.mxu0 0
    %163 = vmatprep.subr.bf16.mxu0 0
    %164 = vmatpush1.bf16.msra.mxu0 0
    %165 = vmatprep.subr.bf16.mxu0 0
    %166 = vmatpush1.bf16.msra.mxu0 0
    %167 = vmatprep.subr.bf16.mxu0 0
    %168 = vmatpush1.bf16.msra.mxu0 0
    %169 = vmatprep.subr.bf16.mxu0 0
    %170 = vmatpush1.bf16.msra.mxu0 0
    %171 = vmatprep.subr.bf16.mxu0 0
    %172 = vmatpush1.bf16.msra.mxu0 0
    %173 = vmatprep.subr.bf16.mxu0 0
    %174 = vmatpush1.bf16.msra.mxu0 0
    %175 = vmatprep.subr.bf16.mxu0 0
    %176 = vmatpush1.bf16.msra.mxu0 0
    %177 = vmatprep.subr.bf16.mxu0 0
    %178 = vmatpush1.bf16.msra.mxu0 0
    %179 = vmatprep.subr.bf16.mxu0 0
    %180 = vmatpush1.bf16.msra.mxu0 0
    %181 = vmatprep.mubr.bf16.mxu0 0
    %182 = vmatmul.mubr.bf16.gmra.mrb[0].mxu0 %v147
    %v183 = vpop.f32.mrb[0].mxu0
    %v184 = vadd.f32 %v128, %v183
    %v185 = vpop.f32.mrb[0].mxu0
    %v186 = vadd.f32 %v132, %v185
    %v187 = vpop.f32.mrb[0].mxu0
    %v188 = vpop.f32.mrb[0].mxu0
    %189 = vdwg.mxu0
    %v190 = vld [vmem:[#allocation8] sm:$0x3]
    %v191 = vld [vmem:[%s5] sm:$0x3]
    %vm192 = vcmask 523264
    %v193 = vsel %vm192, %v186, 0.0
    %v194 = vadd.f32 %v184, %v193
    %195 = vadd.xlane.f32.xlu0 %v194
    %v196 = vpop.xlane.xlu0 %195
    %v197 = vmul.f32 %v184, %v184
    %v198 = vmul.f32 %v186, %v186
    %v199 = vsel %vm192, %v198, 0.0
    %v200 = vadd.f32 %v197, %v199
    %201 = vadd.xlane.f32.xlu0 %v200
    %v202 = vpop.xlane.xlu0 %201
    %v203 = vmul.f32 %v196, 0.0052083335
    %v204 = vmul.f32 %v202, 0.0052083335
    %v205 = vmul.f32 %v203, %v203
    %v206 = vsub.f32 %v204, %v205
    %v207 = vmax.f32 %v206, 0.0
    %v208 = vadd.f32 %v207, 1e-05
    %v209 = vrsqrt.pop %v208
    %v210 = vsub.f32 %v184, %v203
    %v211 = vsub.f32 %v186, %v203
    %v212 = vmul.f32 %v210, %v209
    %v213 = vmul.f32 %v211, %v209
    %v215 = vlaneseq
    %v216 = vshrl.u32 %v215, 7
    %v217 = vsub.s32 0, %v216
    %v218 = vrot.slane %v190, %v217
    %v219 = vlaneseq
    %v220 = vshrl.u32 %v219, 7
    %v221 = vsub.s32 1, %v220
    %v222 = vrot.slane %v190, %v221
    %v225 = vmul.f32 %v212, %v218
    %v226 = vmul.f32 %v213, %v222
    %v228 = vlaneseq
    %v229 = vshrl.u32 %v228, 7
    %v230 = vsub.s32 0, %v229
    %v231 = vrot.slane %v191, %v230
    %v232 = vlaneseq
    %v233 = vshrl.u32 %v232, 7
    %v234 = vsub.s32 1, %v233
    %v235 = vrot.slane %v191, %v234
    %v238 = vadd.f32 %v225, %v231
    %v239 = vadd.f32 %v226, %v235
    %v240 = vmax.f32 %v238, 0.0
    %v241 = vmax.f32 %v239, 0.0
    %v242 = vpack.c.bf16 %v240, %v240
    %v243 = vpack.c.bf16 %v241, %v241
    %v244 = vld [vmem:[#allocation10] sm:$0xff]
    %v245 = vld [vmem:[#allocation10 + $0x8] sm:$0xf]
    %v246 = vld [vmem:[#allocation10 + $0xc] sm:$0xff]
    %v247 = vld [vmem:[#allocation10 + $0x14] sm:$0xf]
    %v248 = vld [vmem:[#allocation10 + $0x18] sm:$0xff]
    %v249 = vld [vmem:[#allocation10 + $0x20] sm:$0xf]
    %v250 = vld [vmem:[#allocation10 + $0x24] sm:$0xff]
    %v251 = vld [vmem:[#allocation10 + $0x2c] sm:$0xf]
    %v252 = vld [vmem:[#allocation10 + $0x30] sm:$0xff]
    %v253 = vld [vmem:[#allocation10 + $0x38] sm:$0xf]
    %v254 = vld [vmem:[#allocation10 + $0x3c] sm:$0xff]
    %v255 = vld [vmem:[#allocation10 + $0x44] sm:$0xf]
    %v256 = vld [vmem:[#allocation10 + $0x48] sm:$0xff]
    %v257 = vld [vmem:[#allocation10 + $0x50] sm:$0xf]
    %v258 = vld [vmem:[#allocation10 + $0x54] sm:$0xff]
    %v259 = vld [vmem:[#allocation10 + $0x5c] sm:$0xf]
    %v260 = vld [vmem:[#allocation10 + $0x60] sm:$0xff]
    %v261 = vld [vmem:[#allocation10 + $0x68] sm:$0xf]
    %v262 = vld [vmem:[#allocation10 + $0x6c] sm:$0xff]
    %v263 = vld [vmem:[#allocation10 + $0x74] sm:$0xf]
    %v264 = vld [vmem:[#allocation10 + $0x78] sm:$0xff]
    %v265 = vld [vmem:[#allocation10 + $0x80] sm:$0xf]
    %v266 = vld [vmem:[#allocation10 + $0x84] sm:$0xff]
    %v267 = vld [vmem:[#allocation10 + $0x8c] sm:$0xf]
    %v268 = vld [vmem:[#allocation10 + $0x90] sm:$0xff]
    %v269 = vld [vmem:[#allocation10 + $0x98] sm:$0xf]
    %v270 = vld [vmem:[#allocation10 + $0x9c] sm:$0xff]
    %v271 = vld [vmem:[#allocation10 + $0xa4] sm:$0xf]
    %v272 = vld [vmem:[#allocation10 + $0xa8] sm:$0xff]
    %v273 = vld [vmem:[#allocation10 + $0xb0] sm:$0xf]
    %v274 = vld [vmem:[#allocation10 + $0xb4] sm:$0xff]
    %v275 = vld [vmem:[#allocation10 + $0xbc] sm:$0xf]
    %v276 = vld [vmem:[#allocation10 + $0xc0] sm:$0xff]
    %v277 = vld [vmem:[#allocation10 + $0xc8] sm:$0xf]
    %v278 = vld [vmem:[#allocation10 + $0xcc] sm:$0xff]
    %v279 = vld [vmem:[#allocation10 + $0xd4] sm:$0xf]
    %v280 = vld [vmem:[#allocation10 + $0xd8] sm:$0xff]
    %v281 = vld [vmem:[#allocation10 + $0xe0] sm:$0xf]
    %v282 = vld [vmem:[#allocation10 + $0xe4] sm:$0xff]
    %v283 = vld [vmem:[#allocation10 + $0xec] sm:$0xf]
    %v284 = vld [vmem:[#allocation10 + $0xf0] sm:$0xff]
    %v285 = vld [vmem:[#allocation10 + $0xf8] sm:$0xf]
    %v286 = vld [vmem:[#allocation10 + $0xfc] sm:$0xff]
    %v287 = vld [vmem:[#allocation10 + $0x104] sm:$0xf]
    %v288 = vld [vmem:[#allocation10 + $0x108] sm:$0xff]
    %v289 = vld [vmem:[#allocation10 + $0x110] sm:$0xf]
    %v290 = vld [vmem:[#allocation10 + $0x114] sm:$0xff]
    %v291 = vld [vmem:[#allocation10 + $0x11c] sm:$0xf]
    %v292 = vld [vmem:[%s7] sm:$0x7]
    %v294 = vlaneseq
    %v295 = vshrl.u32 %v294, 7
    %v296 = vsub.s32 0, %v295
    %v297 = vrot.slane %v292, %v296
    %v298 = vlaneseq
    %v299 = vshrl.u32 %v298, 7
    %v300 = vsub.s32 1, %v299
    %v301 = vrot.slane %v292, %v300
    %v302 = vlaneseq
    %v303 = vshrl.u32 %v302, 7
    %v304 = vsub.s32 2, %v303
    %v305 = vrot.slane %v292, %v304
    %v357 = vunpack.c.l.b16 %v244
    %v358 = vunpack.c.h.b16 %v244
    %v359 = vunpack.c.l.b16 %v245
    %v360 = vunpack.c.l.b16 %v246
    %v361 = vunpack.c.h.b16 %v246
    %v362 = vunpack.c.l.b16 %v247
    %v363 = vunpack.c.l.b16 %v248
    %v364 = vunpack.c.h.b16 %v248
    %v365 = vunpack.c.l.b16 %v249
    %v366 = vunpack.c.l.b16 %v250
    %v367 = vunpack.c.h.b16 %v250
    %v368 = vunpack.c.l.b16 %v251
    %v369 = vunpack.c.l.b16 %v252
    %v370 = vunpack.c.h.b16 %v252
    %v371 = vunpack.c.l.b16 %v253
    %v372 = vunpack.c.l.b16 %v254
    %v373 = vunpack.c.h.b16 %v254
    %v374 = vunpack.c.l.b16 %v255
    %v375 = vunpack.c.l.b16 %v256
    %v376 = vunpack.c.h.b16 %v256
    %v377 = vunpack.c.l.b16 %v257
    %v378 = vunpack.c.l.b16 %v258
    %v379 = vunpack.c.h.b16 %v258
    %v380 = vunpack.c.l.b16 %v259
    %v381 = vunpack.c.l.b16 %v260
    %v382 = vunpack.c.h.b16 %v260
    %v383 = vunpack.c.l.b16 %v261
    %v384 = vunpack.c.l.b16 %v262
    %v385 = vunpack.c.h.b16 %v262
    %v386 = vunpack.c.l.b16 %v263
    %v387 = vunpack.c.l.b16 %v264
    %v388 = vunpack.c.h.b16 %v264
    %v389 = vunpack.c.l.b16 %v265
    %v390 = vunpack.c.l.b16 %v266
    %v391 = vunpack.c.h.b16 %v266
    %v392 = vunpack.c.l.b16 %v267
    %v393 = vunpack.c.l.b16 %v268
    %v394 = vunpack.c.h.b16 %v268
    %v395 = vunpack.c.l.b16 %v269
    %v396 = vunpack.c.l.b16 %v270
    %v397 = vunpack.c.h.b16 %v270
    %v398 = vunpack.c.l.b16 %v271
    %v399 = vunpack.c.l.b16 %v272
    %v400 = vunpack.c.h.b16 %v272
    %v401 = vunpack.c.l.b16 %v273
    %v402 = vunpack.c.l.b16 %v274
    %v403 = vunpack.c.h.b16 %v274
    %v404 = vunpack.c.l.b16 %v275
    %v405 = vunpack.c.l.b16 %v276
    %v406 = vunpack.c.h.b16 %v276
    %v407 = vunpack.c.l.b16 %v277
    %v408 = vunpack.c.l.b16 %v278
    %v409 = vunpack.c.h.b16 %v278
    %v410 = vunpack.c.l.b16 %v279
    %v411 = vunpack.c.l.b16 %v280
    %v412 = vunpack.c.h.b16 %v280
    %v413 = vunpack.c.l.b16 %v281
    %v414 = vunpack.c.l.b16 %v282
    %v415 = vunpack.c.h.b16 %v282
    %v416 = vunpack.c.l.b16 %v283
    %v417 = vunpack.c.l.b16 %v284
    %v418 = vunpack.c.h.b16 %v284
    %v419 = vunpack.c.l.b16 %v285
    %v420 = vunpack.c.l.b16 %v286
    %v421 = vunpack.c.h.b16 %v286
    %v422 = vunpack.c.l.b16 %v287
    %v423 = vunpack.c.l.b16 %v288
    %v424 = vunpack.c.h.b16 %v288
    %v425 = vunpack.c.l.b16 %v289
    %v426 = vunpack.c.l.b16 %v290
    %v427 = vunpack.c.h.b16 %v290
    %v428 = vunpack.c.l.b16 %v291
    %v429 = vpack.c.b16 %v360, %v357
    %v430 = vpack.c.b16 %v361, %v358
    %v431 = vpack.c.b16 %v362, %v359
    %v432 = vpack.c.b16 %v366, %v363
    %v433 = vpack.c.b16 %v367, %v364
    %v434 = vpack.c.b16 %v368, %v365
    %v435 = vpack.c.b16 %v372, %v369
    %v436 = vpack.c.b16 %v373, %v370
    %v437 = vpack.c.b16 %v374, %v371
    %v438 = vpack.c.b16 %v378, %v375
    %v439 = vpack.c.b16 %v379, %v376
    %v440 = vpack.c.b16 %v380, %v377
    %v441 = vpack.c.b16 %v384, %v381
    %v442 = vpack.c.b16 %v385, %v382
    %v443 = vpack.c.b16 %v386, %v383
    %v444 = vpack.c.b16 %v390, %v387
    %v445 = vpack.c.b16 %v391, %v388
    %v446 = vpack.c.b16 %v392, %v389
    %v447 = vpack.c.b16 %v396, %v393
    %v448 = vpack.c.b16 %v397, %v394
    %v449 = vpack.c.b16 %v398, %v395
    %v450 = vpack.c.b16 %v402, %v399
    %v451 = vpack.c.b16 %v403, %v400
    %v452 = vpack.c.b16 %v404, %v401
    %v453 = vpack.c.b16 %v408, %v405
    %v454 = vpack.c.b16 %v409, %v406
    %v455 = vpack.c.b16 %v410, %v407
    %v456 = vpack.c.b16 %v414, %v411
    %v457 = vpack.c.b16 %v415, %v412
    %v458 = vpack.c.b16 %v416, %v413
    %v459 = vpack.c.b16 %v420, %v417
    %v460 = vpack.c.b16 %v421, %v418
    %v461 = vpack.c.b16 %v422, %v419
    %v462 = vpack.c.b16 %v426, %v423
    %v463 = vpack.c.b16 %v427, %v424
    %v464 = vpack.c.b16 %v428, %v425
    %v502 = vsel %vm192, %v243, 0
    %504 = vmatprep.subr.bf16.mxu0 %v430
    %505 = vmatpush1.bf16.msra.mxu0 %v429
    %506 = vmatprep.subr.bf16.mxu0 %v433
    %507 = vmatpush1.bf16.msra.mxu0 %v432
    %508 = vmatprep.subr.bf16.mxu0 %v436
    %509 = vmatpush1.bf16.msra.mxu0 %v435
    %510 = vmatprep.subr.bf16.mxu0 %v439
    %511 = vmatpush1.bf16.msra.mxu0 %v438
    %512 = vmatprep.subr.bf16.mxu0 %v442
    %513 = vmatpush1.bf16.msra.mxu0 %v441
    %514 = vmatprep.subr.bf16.mxu0 %v445
    %515 = vmatpush1.bf16.msra.mxu0 %v444
    %516 = vmatprep.subr.bf16.mxu0 %v448
    %517 = vmatpush1.bf16.msra.mxu0 %v447
    %518 = vmatprep.subr.bf16.mxu0 %v451
    %519 = vmatpush1.bf16.msra.mxu0 %v450
    %520 = vmatprep.subr.bf16.mxu0 %v454
    %521 = vmatpush1.bf16.msra.mxu0 %v453
    %522 = vmatprep.subr.bf16.mxu0 %v457
    %523 = vmatpush1.bf16.msra.mxu0 %v456
    %524 = vmatprep.subr.bf16.mxu0 %v460
    %525 = vmatpush1.bf16.msra.mxu0 %v459
    %526 = vmatprep.subr.bf16.mxu0 %v463
    %527 = vmatpush1.bf16.msra.mxu0 %v462
    %528 = vmatprep.subr.bf16.mxu0 0
    %529 = vmatpush1.bf16.msra.mxu0 0
    %530 = vmatprep.subr.bf16.mxu0 0
    %531 = vmatpush1.bf16.msra.mxu0 0
    %532 = vmatprep.subr.bf16.mxu0 0
    %533 = vmatpush1.bf16.msra.mxu0 0
    %534 = vmatprep.subr.bf16.mxu0 0
    %535 = vmatpush1.bf16.msra.mxu0 0
    %536 = vmatprep.mubr.bf16.mxu0 %v502
    %537 = vmatmul.mubr.bf16.gmra.mrb[0].mxu0 %v242
    %v538 = vpop.f32.mrb[0].mxu0
    %v539 = vadd.f32 %v297, %v538
    %v540 = vpop.f32.mrb[0].mxu0
    %v541 = vadd.f32 %v301, %v540
    %v542 = vpop.f32.mrb[0].mxu0
    %v543 = vpop.f32.mrb[0].mxu0
    %544 = vdwg.mxu0
    %545 = vmatprep.subr.bf16.mxu0 0
    %546 = vmatpush1.bf16.msra.mxu0 %v431
    %547 = vmatprep.subr.bf16.mxu0 0
    %548 = vmatpush1.bf16.msra.mxu0 %v434
    %549 = vmatprep.subr.bf16.mxu0 0
    %550 = vmatpush1.bf16.msra.mxu0 %v437
    %551 = vmatprep.subr.bf16.mxu0 0
    %552 = vmatpush1.bf16.msra.mxu0 %v440
    %553 = vmatprep.subr.bf16.mxu0 0
    %554 = vmatpush1.bf16.msra.mxu0 %v443
    %555 = vmatprep.subr.bf16.mxu0 0
    %556 = vmatpush1.bf16.msra.mxu0 %v446
    %557 = vmatprep.subr.bf16.mxu0 0
    %558 = vmatpush1.bf16.msra.mxu0 %v449
    %559 = vmatprep.subr.bf16.mxu0 0
    %560 = vmatpush1.bf16.msra.mxu0 %v452
    %561 = vmatprep.subr.bf16.mxu0 0
    %562 = vmatpush1.bf16.msra.mxu0 %v455
    %563 = vmatprep.subr.bf16.mxu0 0
    %564 = vmatpush1.bf16.msra.mxu0 %v458
    %565 = vmatprep.subr.bf16.mxu0 0
    %566 = vmatpush1.bf16.msra.mxu0 %v461
    %567 = vmatprep.subr.bf16.mxu0 0
    %568 = vmatpush1.bf16.msra.mxu0 %v464
    %569 = vmatprep.subr.bf16.mxu0 0
    %570 = vmatpush1.bf16.msra.mxu0 0
    %571 = vmatprep.subr.bf16.mxu0 0
    %572 = vmatpush1.bf16.msra.mxu0 0
    %573 = vmatprep.subr.bf16.mxu0 0
    %574 = vmatpush1.bf16.msra.mxu0 0
    %575 = vmatprep.subr.bf16.mxu0 0
    %576 = vmatpush1.bf16.msra.mxu0 0
    %577 = vmatprep.mubr.bf16.mxu0 %v502
    %578 = vmatmul.mubr.bf16.gmra.mrb[0].mxu0 %v242
    %v579 = vpop.f32.mrb[0].mxu0
    %v580 = vadd.f32 %v305, %v579
    %v581 = vpop.f32.mrb[0].mxu0
    %v582 = vpop.f32.mrb[0].mxu0
    %v583 = vpop.f32.mrb[0].mxu0
    %584 = vdwg.mxu0
    %v585 = vld [vmem:[#allocation11] sm:$0xff]
    %v586 = vld [vmem:[#allocation11 + $0x8] sm:$0xf]
    %v587 = vld [vmem:[#allocation11 + $0xc] sm:$0xff]
    %v588 = vld [vmem:[#allocation11 + $0x14] sm:$0xf]
    %v589 = vld [vmem:[#allocation11 + $0x18] sm:$0xff]
    %v590 = vld [vmem:[#allocation11 + $0x20] sm:$0xf]
    %v591 = vld [vmem:[#allocation11 + $0x24] sm:$0xff]
    %v592 = vld [vmem:[#allocation11 + $0x2c] sm:$0xf]
    %v593 = vld [vmem:[#allocation11 + $0x30] sm:$0xff]
    %v594 = vld [vmem:[#allocation11 + $0x38] sm:$0xf]
    %v595 = vld [vmem:[#allocation11 + $0x3c] sm:$0xff]
    %v596 = vld [vmem:[#allocation11 + $0x44] sm:$0xf]
    %v597 = vld [vmem:[#allocation11 + $0x48] sm:$0xff]
    %v598 = vld [vmem:[#allocation11 + $0x50] sm:$0xf]
    %v599 = vld [vmem:[#allocation11 + $0x54] sm:$0xff]
    %v600 = vld [vmem:[#allocation11 + $0x5c] sm:$0xf]
    %v601 = vld [vmem:[#allocation11 + $0x60] sm:$0xff]
    %v602 = vld [vmem:[#allocation11 + $0x68] sm:$0xf]
    %v603 = vld [vmem:[#allocation11 + $0x6c] sm:$0xff]
    %v604 = vld [vmem:[#allocation11 + $0x74] sm:$0xf]
    %v605 = vld [vmem:[#allocation11 + $0x78] sm:$0xff]
    %v606 = vld [vmem:[#allocation11 + $0x80] sm:$0xf]
    %v607 = vld [vmem:[#allocation11 + $0x84] sm:$0xff]
    %v608 = vld [vmem:[#allocation11 + $0x8c] sm:$0xf]
    %v609 = vld [vmem:[#allocation11 + $0x90] sm:$0xff]
    %v610 = vld [vmem:[#allocation11 + $0x98] sm:$0xf]
    %v611 = vld [vmem:[#allocation11 + $0x9c] sm:$0xff]
    %v612 = vld [vmem:[#allocation11 + $0xa4] sm:$0xf]
    %v613 = vld [vmem:[#allocation11 + $0xa8] sm:$0xff]
    %v614 = vld [vmem:[#allocation11 + $0xb0] sm:$0xf]
    %v615 = vld [vmem:[#allocation11 + $0xb4] sm:$0xff]
    %v616 = vld [vmem:[#allocation11 + $0xbc] sm:$0xf]
    %v617 = vld [vmem:[#allocation11 + $0xc0] sm:$0xff]
    %v618 = vld [vmem:[#allocation11 + $0xc8] sm:$0xf]
    %v619 = vld [vmem:[#allocation11 + $0xcc] sm:$0xff]
    %v620 = vld [vmem:[#allocation11 + $0xd4] sm:$0xf]
    %v621 = vld [vmem:[#allocation11 + $0xd8] sm:$0xff]
    %v622 = vld [vmem:[#allocation11 + $0xe0] sm:$0xf]
    %v623 = vld [vmem:[#allocation11 + $0xe4] sm:$0xff]
    %v624 = vld [vmem:[#allocation11 + $0xec] sm:$0xf]
    %v625 = vld [vmem:[#allocation11 + $0xf0] sm:$0xff]
    %v626 = vld [vmem:[#allocation11 + $0xf8] sm:$0xf]
    %v627 = vld [vmem:[#allocation11 + $0xfc] sm:$0xff]
    %v628 = vld [vmem:[#allocation11 + $0x104] sm:$0xf]
    %v629 = vld [vmem:[#allocation11 + $0x108] sm:$0xff]
    %v630 = vld [vmem:[#allocation11 + $0x110] sm:$0xf]
    %v631 = vld [vmem:[#allocation11 + $0x114] sm:$0xff]
    %v632 = vld [vmem:[#allocation11 + $0x11c] sm:$0xf]
    %v633 = vld [vmem:[#allocation11 + $0x120] sm:$0xff]
    %v634 = vld [vmem:[#allocation11 + $0x128] sm:$0xf]
    %v635 = vld [vmem:[#allocation11 + $0x12c] sm:$0xff]
    %v636 = vld [vmem:[#allocation11 + $0x134] sm:$0xf]
    %v637 = vld [vmem:[#allocation11 + $0x138] sm:$0xff]
    %v638 = vld [vmem:[#allocation11 + $0x140] sm:$0xf]
    %v639 = vld [vmem:[#allocation11 + $0x144] sm:$0xff]
    %v640 = vld [vmem:[#allocation11 + $0x14c] sm:$0xf]
    %v641 = vld [vmem:[#allocation11 + $0x150] sm:$0xff]
    %v642 = vld [vmem:[#allocation11 + $0x158] sm:$0xf]
    %v643 = vld [vmem:[#allocation11 + $0x15c] sm:$0xff]
    %v644 = vld [vmem:[#allocation11 + $0x164] sm:$0xf]
    %v645 = vld [vmem:[#allocation11 + $0x168] sm:$0xff]
    %v646 = vld [vmem:[#allocation11 + $0x170] sm:$0xf]
    %v647 = vld [vmem:[#allocation11 + $0x174] sm:$0xff]
    %v648 = vld [vmem:[#allocation11 + $0x17c] sm:$0xf]
    %v649 = vld [vmem:[#allocation11 + $0x180] sm:$0xff]
    %v650 = vld [vmem:[#allocation11 + $0x188] sm:$0xf]
    %v651 = vld [vmem:[#allocation11 + $0x18c] sm:$0xff]
    %v652 = vld [vmem:[#allocation11 + $0x194] sm:$0xf]
    %v653 = vld [vmem:[#allocation11 + $0x198] sm:$0xff]
    %v654 = vld [vmem:[#allocation11 + $0x1a0] sm:$0xf]
    %v655 = vld [vmem:[#allocation11 + $0x1a4] sm:$0xff]
    %v656 = vld [vmem:[#allocation11 + $0x1ac] sm:$0xf]
    %v657 = vld [vmem:[#allocation11 + $0x1b0] sm:$0xff]
    %v658 = vld [vmem:[#allocation11 + $0x1b8] sm:$0xf]
    %v659 = vld [vmem:[#allocation11 + $0x1bc] sm:$0xff]
    %v660 = vld [vmem:[#allocation11 + $0x1c4] sm:$0xf]
    %v661 = vld [vmem:[#allocation11 + $0x1c8] sm:$0xff]
    %v662 = vld [vmem:[#allocation11 + $0x1d0] sm:$0xf]
    %v663 = vld [vmem:[#allocation11 + $0x1d4] sm:$0xff]
    %v664 = vld [vmem:[#allocation11 + $0x1dc] sm:$0xf]
    %v665 = vld [vmem:[#allocation11 + $0x1e0] sm:$0xff]
    %v666 = vld [vmem:[#allocation11 + $0x1e8] sm:$0xf]
    %v667 = vld [vmem:[#allocation11 + $0x1ec] sm:$0xff]
    %v668 = vld [vmem:[#allocation11 + $0x1f4] sm:$0xf]
    %v669 = vld [vmem:[#allocation11 + $0x1f8] sm:$0xff]
    %v670 = vld [vmem:[#allocation11 + $0x200] sm:$0xf]
    %v671 = vld [vmem:[#allocation11 + $0x204] sm:$0xff]
    %v672 = vld [vmem:[#allocation11 + $0x20c] sm:$0xf]
    %v673 = vld [vmem:[#allocation11 + $0x210] sm:$0xff]
    %v674 = vld [vmem:[#allocation11 + $0x218] sm:$0xf]
    %v675 = vld [vmem:[#allocation11 + $0x21c] sm:$0xff]
    %v676 = vld [vmem:[#allocation11 + $0x224] sm:$0xf]
    %v677 = vld [vmem:[#allocation11 + $0x228] sm:$0xff]
    %v678 = vld [vmem:[#allocation11 + $0x230] sm:$0xf]
    %v679 = vld [vmem:[#allocation11 + $0x234] sm:$0xff]
    %v680 = vld [vmem:[#allocation11 + $0x23c] sm:$0xf]
    %v681 = vld [vmem:[#allocation11 + $0x240] sm:$0xff]
    %v682 = vld [vmem:[#allocation11 + $0x248] sm:$0xf]
    %v683 = vld [vmem:[#allocation11 + $0x24c] sm:$0xff]
    %v684 = vld [vmem:[#allocation11 + $0x254] sm:$0xf]
    %v685 = vld [vmem:[#allocation11 + $0x258] sm:$0xff]
    %v686 = vld [vmem:[#allocation11 + $0x260] sm:$0xf]
    %v687 = vld [vmem:[#allocation11 + $0x264] sm:$0xff]
    %v688 = vld [vmem:[#allocation11 + $0x26c] sm:$0xf]
    %v689 = vld [vmem:[#allocation11 + $0x270] sm:$0xff]
    %v690 = vld [vmem:[#allocation11 + $0x278] sm:$0xf]
    %v691 = vld [vmem:[#allocation11 + $0x27c] sm:$0xff]
    %v692 = vld [vmem:[#allocation11 + $0x284] sm:$0xf]
    %v693 = vld [vmem:[#allocation11 + $0x288] sm:$0xff]
    %v694 = vld [vmem:[#allocation11 + $0x290] sm:$0xf]
    %v695 = vld [vmem:[#allocation11 + $0x294] sm:$0xff]
    %v696 = vld [vmem:[#allocation11 + $0x29c] sm:$0xf]
    %v697 = vld [vmem:[#allocation11 + $0x2a0] sm:$0xff]
    %v698 = vld [vmem:[#allocation11 + $0x2a8] sm:$0xf]
    %v699 = vld [vmem:[#allocation11 + $0x2ac] sm:$0xff]
    %v700 = vld [vmem:[#allocation11 + $0x2b4] sm:$0xf]
    %v701 = vld [vmem:[#allocation11 + $0x2b8] sm:$0xff]
    %v702 = vld [vmem:[#allocation11 + $0x2c0] sm:$0xf]
    %v703 = vld [vmem:[#allocation11 + $0x2c4] sm:$0xff]
    %v704 = vld [vmem:[#allocation11 + $0x2cc] sm:$0xf]
    %v705 = vld [vmem:[#allocation11 + $0x2d0] sm:$0xff]
    %v706 = vld [vmem:[#allocation11 + $0x2d8] sm:$0xf]
    %v707 = vld [vmem:[#allocation11 + $0x2dc] sm:$0xff]
    %v708 = vld [vmem:[#allocation11 + $0x2e4] sm:$0xf]
    %v709 = vld [vmem:[#allocation11 + $0x2e8] sm:$0xff]
    %v710 = vld [vmem:[#allocation11 + $0x2f0] sm:$0xf]
    %v711 = vld [vmem:[#allocation11 + $0x2f4] sm:$0xff]
    %v712 = vld [vmem:[#allocation11 + $0x2fc] sm:$0xf]
    %v713 = vld [vmem:[#allocation11 + $0x300] sm:$0xff]
    %v714 = vld [vmem:[#allocation11 + $0x308] sm:$0xf]
    %v715 = vld [vmem:[#allocation11 + $0x30c] sm:$0xff]
    %v716 = vld [vmem:[#allocation11 + $0x314] sm:$0xf]
    %v717 = vld [vmem:[#allocation11 + $0x318] sm:$0xff]
    %v718 = vld [vmem:[#allocation11 + $0x320] sm:$0xf]
    %v719 = vld [vmem:[#allocation11 + $0x324] sm:$0xff]
    %v720 = vld [vmem:[#allocation11 + $0x32c] sm:$0xf]
    %v721 = vld [vmem:[#allocation11 + $0x330] sm:$0xff]
    %v722 = vld [vmem:[#allocation11 + $0x338] sm:$0xf]
    %v723 = vld [vmem:[#allocation11 + $0x33c] sm:$0xff]
    %v724 = vld [vmem:[#allocation11 + $0x344] sm:$0xf]
    %v725 = vld [vmem:[#allocation11 + $0x348] sm:$0xff]
    %v726 = vld [vmem:[#allocation11 + $0x350] sm:$0xf]
    %v727 = vld [vmem:[#allocation11 + $0x354] sm:$0xff]
    %v728 = vld [vmem:[#allocation11 + $0x35c] sm:$0xf]
    %v729 = vld [vmem:[#allocation11 + $0x360] sm:$0xff]
    %v730 = vld [vmem:[#allocation11 + $0x368] sm:$0xf]
    %v731 = vld [vmem:[#allocation11 + $0x36c] sm:$0xff]
    %v732 = vld [vmem:[#allocation11 + $0x374] sm:$0xf]
    %v733 = vld [vmem:[#allocation11 + $0x378] sm:$0xff]
    %v734 = vld [vmem:[#allocation11 + $0x380] sm:$0xf]
    %v735 = vld [vmem:[#allocation11 + $0x384] sm:$0xff]
    %v736 = vld [vmem:[#allocation11 + $0x38c] sm:$0xf]
    %v737 = vld [vmem:[#allocation11 + $0x390] sm:$0xff]
    %v738 = vld [vmem:[#allocation11 + $0x398] sm:$0xf]
    %v739 = vld [vmem:[#allocation11 + $0x39c] sm:$0xff]
    %v740 = vld [vmem:[#allocation11 + $0x3a4] sm:$0xf]
    %v741 = vld [vmem:[#allocation11 + $0x3a8] sm:$0xff]
    %v742 = vld [vmem:[#allocation11 + $0x3b0] sm:$0xf]
    %v743 = vld [vmem:[#allocation11 + $0x3b4] sm:$0xff]
    %v744 = vld [vmem:[#allocation11 + $0x3bc] sm:$0xf]
    %v745 = vld [vmem:[#allocation11 + $0x3c0] sm:$0xff]
    %v746 = vld [vmem:[#allocation11 + $0x3c8] sm:$0xf]
    %v747 = vld [vmem:[#allocation11 + $0x3cc] sm:$0xff]
    %v748 = vld [vmem:[#allocation11 + $0x3d4] sm:$0xf]
    %v749 = vld [vmem:[#allocation11 + $0x3d8] sm:$0xff]
    %v750 = vld [vmem:[#allocation11 + $0x3e0] sm:$0xf]
    %v751 = vld [vmem:[#allocation11 + $0x3e4] sm:$0xff]
    %v752 = vld [vmem:[#allocation11 + $0x3ec] sm:$0xf]
    %v753 = vld [vmem:[#allocation11 + $0x3f0] sm:$0xff]
    %v754 = vld [vmem:[#allocation11 + $0x3f8] sm:$0xf]
    %v755 = vld [vmem:[#allocation11 + $0x3fc] sm:$0xff]
    %v756 = vld [vmem:[#allocation11 + $0x404] sm:$0xf]
    %v757 = vld [vmem:[#allocation11 + $0x408] sm:$0xff]
    %v758 = vld [vmem:[#allocation11 + $0x410] sm:$0xf]
    %v759 = vld [vmem:[#allocation11 + $0x414] sm:$0xff]
    %v760 = vld [vmem:[#allocation11 + $0x41c] sm:$0xf]
    %v761 = vld [vmem:[#allocation11 + $0x420] sm:$0xff]
    %v762 = vld [vmem:[#allocation11 + $0x428] sm:$0xf]
    %v763 = vld [vmem:[#allocation11 + $0x42c] sm:$0xff]
    %v764 = vld [vmem:[#allocation11 + $0x434] sm:$0xf]
    %v765 = vld [vmem:[#allocation11 + $0x438] sm:$0xff]
    %v766 = vld [vmem:[#allocation11 + $0x440] sm:$0xf]
    %v767 = vld [vmem:[#allocation11 + $0x444] sm:$0xff]
    %v768 = vld [vmem:[#allocation11 + $0x44c] sm:$0xf]
    %v769 = vld [vmem:[#allocation11 + $0x450] sm:$0xff]
    %v770 = vld [vmem:[#allocation11 + $0x458] sm:$0xf]
    %v771 = vld [vmem:[#allocation11 + $0x45c] sm:$0xff]
    %v772 = vld [vmem:[#allocation11 + $0x464] sm:$0xf]
    %v773 = vld [vmem:[#allocation11 + $0x468] sm:$0xff]
    %v774 = vld [vmem:[#allocation11 + $0x470] sm:$0xf]
    %v775 = vld [vmem:[#allocation11 + $0x474] sm:$0xff]
    %v776 = vld [vmem:[#allocation11 + $0x47c] sm:$0xf]
    %v777 = vld [vmem:[#allocation2] sm:$0xff]
    %v778 = vld [vmem:[#allocation2 + $0x8] sm:$0xff]
    %v779 = vld [vmem:[#allocation2 + $0x10] sm:$0xff]
    %v780 = vpack.c.bf16 %v777, %v777
    %v781 = vpack.c.bf16 %v778, %v778
    %v782 = vpack.c.bf16 %v779, %v779
    %v783 = vpack.c.bf16 %v539, %v539
    %v784 = vpack.c.bf16 %v541, %v541
    %v785 = vpack.c.bf16 %v580, %v580
    %v882 = vunpack.c.l.b16 %v681
    %v883 = vunpack.c.h.b16 %v681
    %v884 = vunpack.c.l.b16 %v682
    %v885 = vunpack.c.l.b16 %v683
    %v886 = vunpack.c.h.b16 %v683
    %v887 = vunpack.c.l.b16 %v684
    %v888 = vunpack.c.l.b16 %v685
    %v889 = vunpack.c.h.b16 %v685
    %v890 = vunpack.c.l.b16 %v686
    %v891 = vunpack.c.l.b16 %v687
    %v892 = vunpack.c.h.b16 %v687
    %v893 = vunpack.c.l.b16 %v688
    %v894 = vunpack.c.l.b16 %v689
    %v895 = vunpack.c.h.b16 %v689
    %v896 = vunpack.c.l.b16 %v690
    %v897 = vunpack.c.l.b16 %v691
    %v898 = vunpack.c.h.b16 %v691
    %v899 = vunpack.c.l.b16 %v692
    %v900 = vunpack.c.l.b16 %v693
    %v901 = vunpack.c.h.b16 %v693
    %v902 = vunpack.c.l.b16 %v694
    %v903 = vunpack.c.l.b16 %v695
    %v904 = vunpack.c.h.b16 %v695
    %v905 = vunpack.c.l.b16 %v696
    %v906 = vunpack.c.l.b16 %v697
    %v907 = vunpack.c.h.b16 %v697
    %v908 = vunpack.c.l.b16 %v698
    %v909 = vunpack.c.l.b16 %v699
    %v910 = vunpack.c.h.b16 %v699
    %v911 = vunpack.c.l.b16 %v700
    %v912 = vunpack.c.l.b16 %v701
    %v913 = vunpack.c.h.b16 %v701
    %v914 = vunpack.c.l.b16 %v702
    %v915 = vunpack.c.l.b16 %v703
    %v916 = vunpack.c.h.b16 %v703
    %v917 = vunpack.c.l.b16 %v704
    %v918 = vunpack.c.l.b16 %v705
    %v919 = vunpack.c.h.b16 %v705
    %v920 = vunpack.c.l.b16 %v706
    %v921 = vunpack.c.l.b16 %v707
    %v922 = vunpack.c.h.b16 %v707
    %v923 = vunpack.c.l.b16 %v708
    %v924 = vunpack.c.l.b16 %v709
    %v925 = vunpack.c.h.b16 %v709
    %v926 = vunpack.c.l.b16 %v710
    %v927 = vunpack.c.l.b16 %v711
    %v928 = vunpack.c.h.b16 %v711
    %v929 = vunpack.c.l.b16 %v712
    %v930 = vunpack.c.l.b16 %v713
    %v931 = vunpack.c.h.b16 %v713
    %v932 = vunpack.c.l.b16 %v714
    %v933 = vunpack.c.l.b16 %v715
    %v934 = vunpack.c.h.b16 %v715
    %v935 = vunpack.c.l.b16 %v716
    %v936 = vunpack.c.l.b16 %v717
    %v937 = vunpack.c.h.b16 %v717
    %v938 = vunpack.c.l.b16 %v718
    %v939 = vunpack.c.l.b16 %v719
    %v940 = vunpack.c.h.b16 %v719
    %v941 = vunpack.c.l.b16 %v720
    %v942 = vunpack.c.l.b16 %v721
    %v943 = vunpack.c.h.b16 %v721
    %v944 = vunpack.c.l.b16 %v722
    %v945 = vunpack.c.l.b16 %v723
    %v946 = vunpack.c.h.b16 %v723
    %v947 = vunpack.c.l.b16 %v724
    %v948 = vunpack.c.l.b16 %v725
    %v949 = vunpack.c.h.b16 %v725
    %v950 = vunpack.c.l.b16 %v726
    %v951 = vunpack.c.l.b16 %v727
    %v952 = vunpack.c.h.b16 %v727
    %v953 = vunpack.c.l.b16 %v728
    %v954 = vunpack.c.l.b16 %v729
    %v955 = vunpack.c.h.b16 %v729
    %v956 = vunpack.c.l.b16 %v730
    %v957 = vunpack.c.l.b16 %v731
    %v958 = vunpack.c.h.b16 %v731
    %v959 = vunpack.c.l.b16 %v732
    %v960 = vunpack.c.l.b16 %v733
    %v961 = vunpack.c.h.b16 %v733
    %v962 = vunpack.c.l.b16 %v734
    %v963 = vunpack.c.l.b16 %v735
    %v964 = vunpack.c.h.b16 %v735
    %v965 = vunpack.c.l.b16 %v736
    %v966 = vunpack.c.l.b16 %v737
    %v967 = vunpack.c.h.b16 %v737
    %v968 = vunpack.c.l.b16 %v738
    %v969 = vunpack.c.l.b16 %v739
    %v970 = vunpack.c.h.b16 %v739
    %v971 = vunpack.c.l.b16 %v740
    %v972 = vunpack.c.l.b16 %v741
    %v973 = vunpack.c.h.b16 %v741
    %v974 = vunpack.c.l.b16 %v742
    %v975 = vunpack.c.l.b16 %v743
    %v976 = vunpack.c.h.b16 %v743
    %v977 = vunpack.c.l.b16 %v744
    %v978 = vunpack.c.l.b16 %v745
    %v979 = vunpack.c.h.b16 %v745
    %v980 = vunpack.c.l.b16 %v746
    %v981 = vunpack.c.l.b16 %v747
    %v982 = vunpack.c.h.b16 %v747
    %v983 = vunpack.c.l.b16 %v748
    %v984 = vunpack.c.l.b16 %v749
    %v985 = vunpack.c.h.b16 %v749
    %v986 = vunpack.c.l.b16 %v750
    %v987 = vunpack.c.l.b16 %v751
    %v988 = vunpack.c.h.b16 %v751
    %v989 = vunpack.c.l.b16 %v752
    %v990 = vunpack.c.l.b16 %v753
    %v991 = vunpack.c.h.b16 %v753
    %v992 = vunpack.c.l.b16 %v754
    %v993 = vunpack.c.l.b16 %v755
    %v994 = vunpack.c.h.b16 %v755
    %v995 = vunpack.c.l.b16 %v756
    %v996 = vunpack.c.l.b16 %v757
    %v997 = vunpack.c.h.b16 %v757
    %v998 = vunpack.c.l.b16 %v758
    %v999 = vunpack.c.l.b16 %v759
    %v1000 = vunpack.c.h.b16 %v759
    %v1001 = vunpack.c.l.b16 %v760
    %v1002 = vunpack.c.l.b16 %v761
    %v1003 = vunpack.c.h.b16 %v761
    %v1004 = vunpack.c.l.b16 %v762
    %v1005 = vunpack.c.l.b16 %v763
    %v1006 = vunpack.c.h.b16 %v763
    %v1007 = vunpack.c.l.b16 %v764
    %v1008 = vunpack.c.l.b16 %v765
    %v1009 = vunpack.c.h.b16 %v765
    %v1010 = vunpack.c.l.b16 %v766
    %v1011 = vunpack.c.l.b16 %v767
    %v1012 = vunpack.c.h.b16 %v767
    %v1013 = vunpack.c.l.b16 %v768
    %v1014 = vunpack.c.l.b16 %v769
    %v1015 = vunpack.c.h.b16 %v769
    %v1016 = vunpack.c.l.b16 %v770
    %v1017 = vunpack.c.l.b16 %v771
    %v1018 = vunpack.c.h.b16 %v771
    %v1019 = vunpack.c.l.b16 %v772
    %v1020 = vunpack.c.l.b16 %v773
    %v1021 = vunpack.c.h.b16 %v773
    %v1022 = vunpack.c.l.b16 %v774
    %v1023 = vunpack.c.l.b16 %v775
    %v1024 = vunpack.c.h.b16 %v775
    %v1025 = vunpack.c.l.b16 %v776
    %v1026 = vpack.c.b16 %v885, %v882
    %v1027 = vpack.c.b16 %v886, %v883
    %v1028 = vpack.c.b16 %v887, %v884
    %v1029 = vpack.c.b16 %v891, %v888
    %v1030 = vpack.c.b16 %v892, %v889
    %v1031 = vpack.c.b16 %v893, %v890
    %v1032 = vpack.c.b16 %v897, %v894
    %v1033 = vpack.c.b16 %v898, %v895
    %v1034 = vpack.c.b16 %v899, %v896
    %v1035 = vpack.c.b16 %v903, %v900
    %v1036 = vpack.c.b16 %v904, %v901
    %v1037 = vpack.c.b16 %v905, %v902
    %v1038 = vpack.c.b16 %v909, %v906
    %v1039 = vpack.c.b16 %v910, %v907
    %v1040 = vpack.c.b16 %v911, %v908
    %v1041 = vpack.c.b16 %v915, %v912
    %v1042 = vpack.c.b16 %v916, %v913
    %v1043 = vpack.c.b16 %v917, %v914
    %v1044 = vpack.c.b16 %v921, %v918
    %v1045 = vpack.c.b16 %v922, %v919
    %v1046 = vpack.c.b16 %v923, %v920
    %v1047 = vpack.c.b16 %v927, %v924
    %v1048 = vpack.c.b16 %v928, %v925
    %v1049 = vpack.c.b16 %v929, %v926
    %v1050 = vpack.c.b16 %v933, %v930
    %v1051 = vpack.c.b16 %v934, %v931
    %v1052 = vpack.c.b16 %v935, %v932
    %v1053 = vpack.c.b16 %v939, %v936
    %v1054 = vpack.c.b16 %v940, %v937
    %v1055 = vpack.c.b16 %v941, %v938
    %v1056 = vpack.c.b16 %v945, %v942
    %v1057 = vpack.c.b16 %v946, %v943
    %v1058 = vpack.c.b16 %v947, %v944
    %v1059 = vpack.c.b16 %v951, %v948
    %v1060 = vpack.c.b16 %v952, %v949
    %v1061 = vpack.c.b16 %v953, %v950
    %v1062 = vpack.c.b16 %v957, %v954
    %v1063 = vpack.c.b16 %v958, %v955
    %v1064 = vpack.c.b16 %v959, %v956
    %v1065 = vpack.c.b16 %v963, %v960
    %v1066 = vpack.c.b16 %v964, %v961
    %v1067 = vpack.c.b16 %v965, %v962
    %v1068 = vpack.c.b16 %v969, %v966
    %v1069 = vpack.c.b16 %v970, %v967
    %v1070 = vpack.c.b16 %v971, %v968
    %v1071 = vpack.c.b16 %v975, %v972
    %v1072 = vpack.c.b16 %v976, %v973
    %v1073 = vpack.c.b16 %v977, %v974
    %v1074 = vpack.c.b16 %v981, %v978
    %v1075 = vpack.c.b16 %v982, %v979
    %v1076 = vpack.c.b16 %v983, %v980
    %v1077 = vpack.c.b16 %v987, %v984
    %v1078 = vpack.c.b16 %v988, %v985
    %v1079 = vpack.c.b16 %v989, %v986
    %v1080 = vpack.c.b16 %v993, %v990
    %v1081 = vpack.c.b16 %v994, %v991
    %v1082 = vpack.c.b16 %v995, %v992
    %v1083 = vpack.c.b16 %v999, %v996
    %v1084 = vpack.c.b16 %v1000, %v997
    %v1085 = vpack.c.b16 %v1001, %v998
    %v1086 = vpack.c.b16 %v1005, %v1002
    %v1087 = vpack.c.b16 %v1006, %v1003
    %v1088 = vpack.c.b16 %v1007, %v1004
    %v1089 = vpack.c.b16 %v1011, %v1008
    %v1090 = vpack.c.b16 %v1012, %v1009
    %v1091 = vpack.c.b16 %v1013, %v1010
    %v1092 = vpack.c.b16 %v1017, %v1014
    %v1093 = vpack.c.b16 %v1018, %v1015
    %v1094 = vpack.c.b16 %v1019, %v1016
    %v1095 = vpack.c.b16 %v1023, %v1020
    %v1096 = vpack.c.b16 %v1024, %v1021
    %v1097 = vpack.c.b16 %v1025, %v1022
    %1170 = vmatprep.subr.bf16.mxu0 %v1027
    %1171 = vmatpush1.bf16.msra.mxu0 %v1026
    %1172 = vmatprep.subr.bf16.mxu0 %v1030
    %1173 = vmatpush1.bf16.msra.mxu0 %v1029
    %1174 = vmatprep.subr.bf16.mxu0 %v1033
    %1175 = vmatpush1.bf16.msra.mxu0 %v1032
    %1176 = vmatprep.subr.bf16.mxu0 %v1036
    %1177 = vmatpush1.bf16.msra.mxu0 %v1035
    %1178 = vmatprep.subr.bf16.mxu0 %v1039
    %1179 = vmatpush1.bf16.msra.mxu0 %v1038
    %1180 = vmatprep.subr.bf16.mxu0 %v1042
    %1181 = vmatpush1.bf16.msra.mxu0 %v1041
    %1182 = vmatprep.subr.bf16.mxu0 %v1045
    %1183 = vmatpush1.bf16.msra.mxu0 %v1044
    %1184 = vmatprep.subr.bf16.mxu0 %v1048
    %1185 = vmatpush1.bf16.msra.mxu0 %v1047
    %1186 = vmatprep.subr.bf16.mxu0 %v1051
    %1187 = vmatpush1.bf16.msra.mxu0 %v1050
    %1188 = vmatprep.subr.bf16.mxu0 %v1054
    %1189 = vmatpush1.bf16.msra.mxu0 %v1053
    %1190 = vmatprep.subr.bf16.mxu0 %v1057
    %1191 = vmatpush1.bf16.msra.mxu0 %v1056
    %1192 = vmatprep.subr.bf16.mxu0 %v1060
    %1193 = vmatpush1.bf16.msra.mxu0 %v1059
    %1194 = vmatprep.subr.bf16.mxu0 %v1063
    %1195 = vmatpush1.bf16.msra.mxu0 %v1062
    %1196 = vmatprep.subr.bf16.mxu0 %v1066
    %1197 = vmatpush1.bf16.msra.mxu0 %v1065
    %1198 = vmatprep.subr.bf16.mxu0 %v1069
    %1199 = vmatpush1.bf16.msra.mxu0 %v1068
    %1200 = vmatprep.subr.bf16.mxu0 %v1072
    %1201 = vmatpush1.bf16.msra.mxu0 %v1071
    %1202 = vmatprep.mubr.bf16.mxu0 %v784
    %1203 = vmatmul.mubr.bf16.gmra.mrb[0].mxu0 %v783
    %v1204 = vpop.f32.mrb[0].mxu0
    %v1205 = vadd.f32 0.0, %v1204
    %v1206 = vpop.f32.mrb[0].mxu0
    %v1207 = vadd.f32 0.0, %v1206
    %v1208 = vpop.f32.mrb[0].mxu0
    %v1209 = vpop.f32.mrb[0].mxu0
    %1210 = vdwg.mxu0
    %1211 = vmatprep.subr.bf16.mxu0 %v1075
    %1212 = vmatpush1.bf16.msra.mxu0 %v1074
    %1213 = vmatprep.subr.bf16.mxu0 %v1078
    %1214 = vmatpush1.bf16.msra.mxu0 %v1077
    %1215 = vmatprep.subr.bf16.mxu0 %v1081
    %1216 = vmatpush1.bf16.msra.mxu0 %v1080
    %1217 = vmatprep.subr.bf16.mxu0 %v1084
    %1218 = vmatpush1.bf16.msra.mxu0 %v1083
    %1219 = vmatprep.subr.bf16.mxu0 %v1087
    %1220 = vmatpush1.bf16.msra.mxu0 %v1086
    %1221 = vmatprep.subr.bf16.mxu0 %v1090
    %1222 = vmatpush1.bf16.msra.mxu0 %v1089
    %1223 = vmatprep.subr.bf16.mxu0 %v1093
    %1224 = vmatpush1.bf16.msra.mxu0 %v1092
    %1225 = vmatprep.subr.bf16.mxu0 %v1096
    %1226 = vmatpush1.bf16.msra.mxu0 %v1095
    %1227 = vmatprep.subr.bf16.mxu0 0
    %1228 = vmatpush1.bf16.msra.mxu0 0
    %1229 = vmatprep.subr.bf16.mxu0 0
    %1230 = vmatpush1.bf16.msra.mxu0 0
    %1231 = vmatprep.subr.bf16.mxu0 0
    %1232 = vmatpush1.bf16.msra.mxu0 0
    %1233 = vmatprep.subr.bf16.mxu0 0
    %1234 = vmatpush1.bf16.msra.mxu0 0
    %1235 = vmatprep.subr.bf16.mxu0 0
    %1236 = vmatpush1.bf16.msra.mxu0 0
    %1237 = vmatprep.subr.bf16.mxu0 0
    %1238 = vmatpush1.bf16.msra.mxu0 0
    %1239 = vmatprep.subr.bf16.mxu0 0
    %1240 = vmatpush1.bf16.msra.mxu0 0
    %1241 = vmatprep.subr.bf16.mxu0 0
    %1242 = vmatpush1.bf16.msra.mxu0 0
    %1243 = vmatprep.mubr.bf16.mxu0 0
    %1244 = vmatmul.mubr.bf16.gmra.mrb[0].mxu0 %v785
    %v1245 = vpop.f32.mrb[0].mxu0
    %v1246 = vadd.f32 %v1205, %v1245
    %v1247 = vpop.f32.mrb[0].mxu0
    %v1248 = vadd.f32 %v1207, %v1247
    %v1249 = vpop.f32.mrb[0].mxu0
    %v1250 = vpop.f32.mrb[0].mxu0
    %1251 = vdwg.mxu0
    %1252 = vmatprep.subr.bf16.mxu0 0
    %1253 = vmatpush1.bf16.msra.mxu0 %v1028
    %1254 = vmatprep.subr.bf16.mxu0 0
    %1255 = vmatpush1.bf16.msra.mxu0 %v1031
    %1256 = vmatprep.subr.bf16.mxu0 0
    %1257 = vmatpush1.bf16.msra.mxu0 %v1034
    %1258 = vmatprep.subr.bf16.mxu0 0
    %1259 = vmatpush1.bf16.msra.mxu0 %v1037
    %1260 = vmatprep.subr.bf16.mxu0 0
    %1261 = vmatpush1.bf16.msra.mxu0 %v1040
    %1262 = vmatprep.subr.bf16.mxu0 0
    %1263 = vmatpush1.bf16.msra.mxu0 %v1043
    %1264 = vmatprep.subr.bf16.mxu0 0
    %1265 = vmatpush1.bf16.msra.mxu0 %v1046
    %1266 = vmatprep.subr.bf16.mxu0 0
    %1267 = vmatpush1.bf16.msra.mxu0 %v1049
    %1268 = vmatprep.subr.bf16.mxu0 0
    %1269 = vmatpush1.bf16.msra.mxu0 %v1052
    %1270 = vmatprep.subr.bf16.mxu0 0
    %1271 = vmatpush1.bf16.msra.mxu0 %v1055
    %1272 = vmatprep.subr.bf16.mxu0 0
    %1273 = vmatpush1.bf16.msra.mxu0 %v1058
    %1274 = vmatprep.subr.bf16.mxu0 0
    %1275 = vmatpush1.bf16.msra.mxu0 %v1061
    %1276 = vmatprep.subr.bf16.mxu0 0
    %1277 = vmatpush1.bf16.msra.mxu0 %v1064
    %1278 = vmatprep.subr.bf16.mxu0 0
    %1279 = vmatpush1.bf16.msra.mxu0 %v1067
    %1280 = vmatprep.subr.bf16.mxu0 0
    %1281 = vmatpush1.bf16.msra.mxu0 %v1070
    %1282 = vmatprep.subr.bf16.mxu0 0
    %1283 = vmatpush1.bf16.msra.mxu0 %v1073
    %1284 = vmatprep.mubr.bf16.mxu0 %v784
    %1285 = vmatmul.mubr.bf16.gmra.mrb[0].mxu0 %v783
    %v1286 = vpop.f32.mrb[0].mxu0
    %v1287 = vadd.f32 0.0, %v1286
    %v1288 = vpop.f32.mrb[0].mxu0
    %v1289 = vpop.f32.mrb[0].mxu0
    %v1290 = vpop.f32.mrb[0].mxu0
    %1291 = vdwg.mxu0
    %1292 = vmatprep.subr.bf16.mxu0 0
    %1293 = vmatpush1.bf16.msra.mxu0 %v1076
    %1294 = vmatprep.subr.bf16.mxu0 0
    %1295 = vmatpush1.bf16.msra.mxu0 %v1079
    %1296 = vmatprep.subr.bf16.mxu0 0
    %1297 = vmatpush1.bf16.msra.mxu0 %v1082
    %1298 = vmatprep.subr.bf16.mxu0 0
    %1299 = vmatpush1.bf16.msra.mxu0 %v1085
    %1300 = vmatprep.subr.bf16.mxu0 0
    %1301 = vmatpush1.bf16.msra.mxu0 %v1088
    %1302 = vmatprep.subr.bf16.mxu0 0
    %1303 = vmatpush1.bf16.msra.mxu0 %v1091
    %1304 = vmatprep.subr.bf16.mxu0 0
    %1305 = vmatpush1.bf16.msra.mxu0 %v1094
    %1306 = vmatprep.subr.bf16.mxu0 0
    %1307 = vmatpush1.bf16.msra.mxu0 %v1097
    %1308 = vmatprep.subr.bf16.mxu0 0
    %1309 = vmatpush1.bf16.msra.mxu0 0
    %1310 = vmatprep.subr.bf16.mxu0 0
    %1311 = vmatpush1.bf16.msra.mxu0 0
    %1312 = vmatprep.subr.bf16.mxu0 0
    %1313 = vmatpush1.bf16.msra.mxu0 0
    %1314 = vmatprep.subr.bf16.mxu0 0
    %1315 = vmatpush1.bf16.msra.mxu0 0
    %1316 = vmatprep.subr.bf16.mxu0 0
    %1317 = vmatpush1.bf16.msra.mxu0 0
    %1318 = vmatprep.subr.bf16.mxu0 0
    %1319 = vmatpush1.bf16.msra.mxu0 0
    %1320 = vmatprep.subr.bf16.mxu0 0
    %1321 = vmatpush1.bf16.msra.mxu0 0
    %1322 = vmatprep.subr.bf16.mxu0 0
    %1323 = vmatpush1.bf16.msra.mxu0 0
    %1324 = vmatprep.mubr.bf16.mxu0 0
    %1325 = vmatmul.mubr.bf16.gmra.mrb[0].mxu0 %v785
    %v1326 = vpop.f32.mrb[0].mxu0
    %v1327 = vadd.f32 %v1287, %v1326
    %v1328 = vpop.f32.mrb[0].mxu0
    %v1329 = vpop.f32.mrb[0].mxu0
    %v1330 = vpop.f32.mrb[0].mxu0
    %1331 = vdwg.mxu0
    %v1428 = vunpack.c.l.b16 %v585
    %v1429 = vunpack.c.h.b16 %v585
    %v1430 = vunpack.c.l.b16 %v586
    %v1431 = vunpack.c.l.b16 %v587
    %v1432 = vunpack.c.h.b16 %v587
    %v1433 = vunpack.c.l.b16 %v588
    %v1434 = vunpack.c.l.b16 %v589
    %v1435 = vunpack.c.h.b16 %v589
    %v1436 = vunpack.c.l.b16 %v590
    %v1437 = vunpack.c.l.b16 %v591
    %v1438 = vunpack.c.h.b16 %v591
    %v1439 = vunpack.c.l.b16 %v592
    %v1440 = vunpack.c.l.b16 %v593
    %v1441 = vunpack.c.h.b16 %v593
    %v1442 = vunpack.c.l.b16 %v594
    %v1443 = vunpack.c.l.b16 %v595
    %v1444 = vunpack.c.h.b16 %v595
    %v1445 = vunpack.c.l.b16 %v596
    %v1446 = vunpack.c.l.b16 %v597
    %v1447 = vunpack.c.h.b16 %v597
    %v1448 = vunpack.c.l.b16 %v598
    %v1449 = vunpack.c.l.b16 %v599
    %v1450 = vunpack.c.h.b16 %v599
    %v1451 = vunpack.c.l.b16 %v600
    %v1452 = vunpack.c.l.b16 %v601
    %v1453 = vunpack.c.h.b16 %v601
    %v1454 = vunpack.c.l.b16 %v602
    %v1455 = vunpack.c.l.b16 %v603
    %v1456 = vunpack.c.h.b16 %v603
    %v1457 = vunpack.c.l.b16 %v604
    %v1458 = vunpack.c.l.b16 %v605
    %v1459 = vunpack.c.h.b16 %v605
    %v1460 = vunpack.c.l.b16 %v606
    %v1461 = vunpack.c.l.b16 %v607
    %v1462 = vunpack.c.h.b16 %v607
    %v1463 = vunpack.c.l.b16 %v608
    %v1464 = vunpack.c.l.b16 %v609
    %v1465 = vunpack.c.h.b16 %v609
    %v1466 = vunpack.c.l.b16 %v610
    %v1467 = vunpack.c.l.b16 %v611
    %v1468 = vunpack.c.h.b16 %v611
    %v1469 = vunpack.c.l.b16 %v612
    %v1470 = vunpack.c.l.b16 %v613
    %v1471 = vunpack.c.h.b16 %v613
    %v1472 = vunpack.c.l.b16 %v614
    %v1473 = vunpack.c.l.b16 %v615
    %v1474 = vunpack.c.h.b16 %v615
    %v1475 = vunpack.c.l.b16 %v616
    %v1476 = vunpack.c.l.b16 %v617
    %v1477 = vunpack.c.h.b16 %v617
    %v1478 = vunpack.c.l.b16 %v618
    %v1479 = vunpack.c.l.b16 %v619
    %v1480 = vunpack.c.h.b16 %v619
    %v1481 = vunpack.c.l.b16 %v620
    %v1482 = vunpack.c.l.b16 %v621
    %v1483 = vunpack.c.h.b16 %v621
    %v1484 = vunpack.c.l.b16 %v622
    %v1485 = vunpack.c.l.b16 %v623
    %v1486 = vunpack.c.h.b16 %v623
    %v1487 = vunpack.c.l.b16 %v624
    %v1488 = vunpack.c.l.b16 %v625
    %v1489 = vunpack.c.h.b16 %v625
    %v1490 = vunpack.c.l.b16 %v626
    %v1491 = vunpack.c.l.b16 %v627
    %v1492 = vunpack.c.h.b16 %v627
    %v1493 = vunpack.c.l.b16 %v628
    %v1494 = vunpack.c.l.b16 %v629
    %v1495 = vunpack.c.h.b16 %v629
    %v1496 = vunpack.c.l.b16 %v630
    %v1497 = vunpack.c.l.b16 %v631
    %v1498 = vunpack.c.h.b16 %v631
    %v1499 = vunpack.c.l.b16 %v632
    %v1500 = vunpack.c.l.b16 %v633
    %v1501 = vunpack.c.h.b16 %v633
    %v1502 = vunpack.c.l.b16 %v634
    %v1503 = vunpack.c.l.b16 %v635
    %v1504 = vunpack.c.h.b16 %v635
    %v1505 = vunpack.c.l.b16 %v636
    %v1506 = vunpack.c.l.b16 %v637
    %v1507 = vunpack.c.h.b16 %v637
    %v1508 = vunpack.c.l.b16 %v638
    %v1509 = vunpack.c.l.b16 %v639
    %v1510 = vunpack.c.h.b16 %v639
    %v1511 = vunpack.c.l.b16 %v640
    %v1512 = vunpack.c.l.b16 %v641
    %v1513 = vunpack.c.h.b16 %v641
    %v1514 = vunpack.c.l.b16 %v642
    %v1515 = vunpack.c.l.b16 %v643
    %v1516 = vunpack.c.h.b16 %v643
    %v1517 = vunpack.c.l.b16 %v644
    %v1518 = vunpack.c.l.b16 %v645
    %v1519 = vunpack.c.h.b16 %v645
    %v1520 = vunpack.c.l.b16 %v646
    %v1521 = vunpack.c.l.b16 %v647
    %v1522 = vunpack.c.h.b16 %v647
    %v1523 = vunpack.c.l.b16 %v648
    %v1524 = vunpack.c.l.b16 %v649
    %v1525 = vunpack.c.h.b16 %v649
    %v1526 = vunpack.c.l.b16 %v650
    %v1527 = vunpack.c.l.b16 %v651
    %v1528 = vunpack.c.h.b16 %v651
    %v1529 = vunpack.c.l.b16 %v652
    %v1530 = vunpack.c.l.b16 %v653
    %v1531 = vunpack.c.h.b16 %v653
    %v1532 = vunpack.c.l.b16 %v654
    %v1533 = vunpack.c.l.b16 %v655
    %v1534 = vunpack.c.h.b16 %v655
    %v1535 = vunpack.c.l.b16 %v656
    %v1536 = vunpack.c.l.b16 %v657
    %v1537 = vunpack.c.h.b16 %v657
    %v1538 = vunpack.c.l.b16 %v658
    %v1539 = vunpack.c.l.b16 %v659
    %v1540 = vunpack.c.h.b16 %v659
    %v1541 = vunpack.c.l.b16 %v660
    %v1542 = vunpack.c.l.b16 %v661
    %v1543 = vunpack.c.h.b16 %v661
    %v1544 = vunpack.c.l.b16 %v662
    %v1545 = vunpack.c.l.b16 %v663
    %v1546 = vunpack.c.h.b16 %v663
    %v1547 = vunpack.c.l.b16 %v664
    %v1548 = vunpack.c.l.b16 %v665
    %v1549 = vunpack.c.h.b16 %v665
    %v1550 = vunpack.c.l.b16 %v666
    %v1551 = vunpack.c.l.b16 %v667
    %v1552 = vunpack.c.h.b16 %v667
    %v1553 = vunpack.c.l.b16 %v668
    %v1554 = vunpack.c.l.b16 %v669
    %v1555 = vunpack.c.h.b16 %v669
    %v1556 = vunpack.c.l.b16 %v670
    %v1557 = vunpack.c.l.b16 %v671
    %v1558 = vunpack.c.h.b16 %v671
    %v1559 = vunpack.c.l.b16 %v672
    %v1560 = vunpack.c.l.b16 %v673
    %v1561 = vunpack.c.h.b16 %v673
    %v1562 = vunpack.c.l.b16 %v674
    %v1563 = vunpack.c.l.b16 %v675
    %v1564 = vunpack.c.h.b16 %v675
    %v1565 = vunpack.c.l.b16 %v676
    %v1566 = vunpack.c.l.b16 %v677
    %v1567 = vunpack.c.h.b16 %v677
    %v1568 = vunpack.c.l.b16 %v678
    %v1569 = vunpack.c.l.b16 %v679
    %v1570 = vunpack.c.h.b16 %v679
    %v1571 = vunpack.c.l.b16 %v680
    %v1572 = vpack.c.b16 %v1431, %v1428
    %v1573 = vpack.c.b16 %v1432, %v1429
    %v1574 = vpack.c.b16 %v1433, %v1430
    %v1575 = vpack.c.b16 %v1437, %v1434
    %v1576 = vpack.c.b16 %v1438, %v1435
    %v1577 = vpack.c.b16 %v1439, %v1436
    %v1578 = vpack.c.b16 %v1443, %v1440
    %v1579 = vpack.c.b16 %v1444, %v1441
    %v1580 = vpack.c.b16 %v1445, %v1442
    %v1581 = vpack.c.b16 %v1449, %v1446
    %v1582 = vpack.c.b16 %v1450, %v1447
    %v1583 = vpack.c.b16 %v1451, %v1448
    %v1584 = vpack.c.b16 %v1455, %v1452
    %v1585 = vpack.c.b16 %v1456, %v1453
    %v1586 = vpack.c.b16 %v1457, %v1454
    %v1587 = vpack.c.b16 %v1461, %v1458
    %v1588 = vpack.c.b16 %v1462, %v1459
    %v1589 = vpack.c.b16 %v1463, %v1460
    %v1590 = vpack.c.b16 %v1467, %v1464
    %v1591 = vpack.c.b16 %v1468, %v1465
    %v1592 = vpack.c.b16 %v1469, %v1466
    %v1593 = vpack.c.b16 %v1473, %v1470
    %v1594 = vpack.c.b16 %v1474, %v1471
    %v1595 = vpack.c.b16 %v1475, %v1472
    %v1596 = vpack.c.b16 %v1479, %v1476
    %v1597 = vpack.c.b16 %v1480, %v1477
    %v1598 = vpack.c.b16 %v1481, %v1478
    %v1599 = vpack.c.b16 %v1485, %v1482
    %v1600 = vpack.c.b16 %v1486, %v1483
    %v1601 = vpack.c.b16 %v1487, %v1484
    %v1602 = vpack.c.b16 %v1491, %v1488
    %v1603 = vpack.c.b16 %v1492, %v1489
    %v1604 = vpack.c.b16 %v1493, %v1490
    %v1605 = vpack.c.b16 %v1497, %v1494
    %v1606 = vpack.c.b16 %v1498, %v1495
    %v1607 = vpack.c.b16 %v1499, %v1496
    %v1608 = vpack.c.b16 %v1503, %v1500
    %v1609 = vpack.c.b16 %v1504, %v1501
    %v1610 = vpack.c.b16 %v1505, %v1502
    %v1611 = vpack.c.b16 %v1509, %v1506
    %v1612 = vpack.c.b16 %v1510, %v1507
    %v1613 = vpack.c.b16 %v1511, %v1508
    %v1614 = vpack.c.b16 %v1515, %v1512
    %v1615 = vpack.c.b16 %v1516, %v1513
    %v1616 = vpack.c.b16 %v1517, %v1514
    %v1617 = vpack.c.b16 %v1521, %v1518
    %v1618 = vpack.c.b16 %v1522, %v1519
    %v1619 = vpack.c.b16 %v1523, %v1520
    %v1620 = vpack.c.b16 %v1527, %v1524
    %v1621 = vpack.c.b16 %v1528, %v1525
    %v1622 = vpack.c.b16 %v1529, %v1526
    %v1623 = vpack.c.b16 %v1533, %v1530
    %v1624 = vpack.c.b16 %v1534, %v1531
    %v1625 = vpack.c.b16 %v1535, %v1532
    %v1626 = vpack.c.b16 %v1539, %v1536
    %v1627 = vpack.c.b16 %v1540, %v1537
    %v1628 = vpack.c.b16 %v1541, %v1538
    %v1629 = vpack.c.b16 %v1545, %v1542
    %v1630 = vpack.c.b16 %v1546, %v1543
    %v1631 = vpack.c.b16 %v1547, %v1544
    %v1632 = vpack.c.b16 %v1551, %v1548
    %v1633 = vpack.c.b16 %v1552, %v1549
    %v1634 = vpack.c.b16 %v1553, %v1550
    %v1635 = vpack.c.b16 %v1557, %v1554
    %v1636 = vpack.c.b16 %v1558, %v1555
    %v1637 = vpack.c.b16 %v1559, %v1556
    %v1638 = vpack.c.b16 %v1563, %v1560
    %v1639 = vpack.c.b16 %v1564, %v1561
    %v1640 = vpack.c.b16 %v1565, %v1562
    %v1641 = vpack.c.b16 %v1569, %v1566
    %v1642 = vpack.c.b16 %v1570, %v1567
    %v1643 = vpack.c.b16 %v1571, %v1568
    %1716 = vmatprep.subr.bf16.mxu0 %v1573
    %1717 = vmatpush1.bf16.msra.mxu0 %v1572
    %1718 = vmatprep.subr.bf16.mxu0 %v1576
    %1719 = vmatpush1.bf16.msra.mxu0 %v1575
    %1720 = vmatprep.subr.bf16.mxu0 %v1579
    %1721 = vmatpush1.bf16.msra.mxu0 %v1578
    %1722 = vmatprep.subr.bf16.mxu0 %v1582
    %1723 = vmatpush1.bf16.msra.mxu0 %v1581
    %1724 = vmatprep.subr.bf16.mxu0 %v1585
    %1725 = vmatpush1.bf16.msra.mxu0 %v1584
    %1726 = vmatprep.subr.bf16.mxu0 %v1588
    %1727 = vmatpush1.bf16.msra.mxu0 %v1587
    %1728 = vmatprep.subr.bf16.mxu0 %v1591
    %1729 = vmatpush1.bf16.msra.mxu0 %v1590
    %1730 = vmatprep.subr.bf16.mxu0 %v1594
    %1731 = vmatpush1.bf16.msra.mxu0 %v1593
    %1732 = vmatprep.subr.bf16.mxu0 %v1597
    %1733 = vmatpush1.bf16.msra.mxu0 %v1596
    %1734 = vmatprep.subr.bf16.mxu0 %v1600
    %1735 = vmatpush1.bf16.msra.mxu0 %v1599
    %1736 = vmatprep.subr.bf16.mxu0 %v1603
    %1737 = vmatpush1.bf16.msra.mxu0 %v1602
    %1738 = vmatprep.subr.bf16.mxu0 %v1606
    %1739 = vmatpush1.bf16.msra.mxu0 %v1605
    %1740 = vmatprep.subr.bf16.mxu0 %v1609
    %1741 = vmatpush1.bf16.msra.mxu0 %v1608
    %1742 = vmatprep.subr.bf16.mxu0 %v1612
    %1743 = vmatpush1.bf16.msra.mxu0 %v1611
    %1744 = vmatprep.subr.bf16.mxu0 %v1615
    %1745 = vmatpush1.bf16.msra.mxu0 %v1614
    %1746 = vmatprep.subr.bf16.mxu0 %v1618
    %1747 = vmatpush1.bf16.msra.mxu0 %v1617
    %1748 = vmatprep.mubr.bf16.mxu0 %v781
    %1749 = vmatmul.mubr.bf16.gmra.mrb[0].mxu0 %v780
    %v1750 = vpop.f32.mrb[0].mxu0
    %v1751 = vadd.f32 %v1246, %v1750
    %v1752 = vpop.f32.mrb[0].mxu0
    %v1753 = vadd.f32 %v1248, %v1752
    %v1754 = vpop.f32.mrb[0].mxu0
    %v1755 = vpop.f32.mrb[0].mxu0
    %1756 = vdwg.mxu0
    %1757 = vmatprep.subr.bf16.mxu0 %v1621
    %1758 = vmatpush1.bf16.msra.mxu0 %v1620
    %1759 = vmatprep.subr.bf16.mxu0 %v1624
    %1760 = vmatpush1.bf16.msra.mxu0 %v1623
    %1761 = vmatprep.subr.bf16.mxu0 %v1627
    %1762 = vmatpush1.bf16.msra.mxu0 %v1626
    %1763 = vmatprep.subr.bf16.mxu0 %v1630
    %1764 = vmatpush1.bf16.msra.mxu0 %v1629
    %1765 = vmatprep.subr.bf16.mxu0 %v1633
    %1766 = vmatpush1.bf16.msra.mxu0 %v1632
    %1767 = vmatprep.subr.bf16.mxu0 %v1636
    %1768 = vmatpush1.bf16.msra.mxu0 %v1635
    %1769 = vmatprep.subr.bf16.mxu0 %v1639
    %1770 = vmatpush1.bf16.msra.mxu0 %v1638
    %1771 = vmatprep.subr.bf16.mxu0 %v1642
    %1772 = vmatpush1.bf16.msra.mxu0 %v1641
    %1773 = vmatprep.subr.bf16.mxu0 0
    %1774 = vmatpush1.bf16.msra.mxu0 0
    %1775 = vmatprep.subr.bf16.mxu0 0
    %1776 = vmatpush1.bf16.msra.mxu0 0
    %1777 = vmatprep.subr.bf16.mxu0 0
    %1778 = vmatpush1.bf16.msra.mxu0 0
    %1779 = vmatprep.subr.bf16.mxu0 0
    %1780 = vmatpush1.bf16.msra.mxu0 0
    %1781 = vmatprep.subr.bf16.mxu0 0
    %1782 = vmatpush1.bf16.msra.mxu0 0
    %1783 = vmatprep.subr.bf16.mxu0 0
    %1784 = vmatpush1.bf16.msra.mxu0 0
    %1785 = vmatprep.subr.bf16.mxu0 0
    %1786 = vmatpush1.bf16.msra.mxu0 0
    %1787 = vmatprep.subr.bf16.mxu0 0
    %1788 = vmatpush1.bf16.msra.mxu0 0
    %1789 = vmatprep.mubr.bf16.mxu0 0
    %1790 = vmatmul.mubr.bf16.gmra.mrb[0].mxu0 %v782
    %v1791 = vpop.f32.mrb[0].mxu0
    %v1792 = vadd.f32 %v1751, %v1791
    %v1793 = vpop.f32.mrb[0].mxu0
    %v1794 = vadd.f32 %v1753, %v1793
    %v1795 = vpop.f32.mrb[0].mxu0
    %v1796 = vpop.f32.mrb[0].mxu0
    %1797 = vdwg.mxu0
    %1798 = vmatprep.subr.bf16.mxu0 0
    %1799 = vmatpush1.bf16.msra.mxu0 %v1574
    %1800 = vmatprep.subr.bf16.mxu0 0
    %1801 = vmatpush1.bf16.msra.mxu0 %v1577
    %1802 = vmatprep.subr.bf16.mxu0 0
    %1803 = vmatpush1.bf16.msra.mxu0 %v1580
    %1804 = vmatprep.subr.bf16.mxu0 0
    %1805 = vmatpush1.bf16.msra.mxu0 %v1583
    %1806 = vmatprep.subr.bf16.mxu0 0
    %1807 = vmatpush1.bf16.msra.mxu0 %v1586
    %1808 = vmatprep.subr.bf16.mxu0 0
    %1809 = vmatpush1.bf16.msra.mxu0 %v1589
    %1810 = vmatprep.subr.bf16.mxu0 0
    %1811 = vmatpush1.bf16.msra.mxu0 %v1592
    %1812 = vmatprep.subr.bf16.mxu0 0
    %1813 = vmatpush1.bf16.msra.mxu0 %v1595
    %1814 = vmatprep.subr.bf16.mxu0 0
    %1815 = vmatpush1.bf16.msra.mxu0 %v1598
    %1816 = vmatprep.subr.bf16.mxu0 0
    %1817 = vmatpush1.bf16.msra.mxu0 %v1601
    %1818 = vmatprep.subr.bf16.mxu0 0
    %1819 = vmatpush1.bf16.msra.mxu0 %v1604
    %1820 = vmatprep.subr.bf16.mxu0 0
    %1821 = vmatpush1.bf16.msra.mxu0 %v1607
    %1822 = vmatprep.subr.bf16.mxu0 0
    %1823 = vmatpush1.bf16.msra.mxu0 %v1610
    %1824 = vmatprep.subr.bf16.mxu0 0
    %1825 = vmatpush1.bf16.msra.mxu0 %v1613
    %1826 = vmatprep.subr.bf16.mxu0 0
    %1827 = vmatpush1.bf16.msra.mxu0 %v1616
    %1828 = vmatprep.subr.bf16.mxu0 0
    %1829 = vmatpush1.bf16.msra.mxu0 %v1619
    %1830 = vmatprep.mubr.bf16.mxu0 %v781
    %1831 = vmatmul.mubr.bf16.gmra.mrb[0].mxu0 %v780
    %v1832 = vpop.f32.mrb[0].mxu0
    %v1833 = vadd.f32 %v1327, %v1832
    %v1834 = vpop.f32.mrb[0].mxu0
    %v1835 = vpop.f32.mrb[0].mxu0
    %v1836 = vpop.f32.mrb[0].mxu0
    %1837 = vdwg.mxu0
    %1838 = vmatprep.subr.bf16.mxu0 0
    %1839 = vmatpush1.bf16.msra.mxu0 %v1622
    %1840 = vmatprep.subr.bf16.mxu0 0
    %1841 = vmatpush1.bf16.msra.mxu0 %v1625
    %1842 = vmatprep.subr.bf16.mxu0 0
    %1843 = vmatpush1.bf16.msra.mxu0 %v1628
    %1844 = vmatprep.subr.bf16.mxu0 0
    %1845 = vmatpush1.bf16.msra.mxu0 %v1631
    %1846 = vmatprep.subr.bf16.mxu0 0
    %1847 = vmatpush1.bf16.msra.mxu0 %v1634
    %1848 = vmatprep.subr.bf16.mxu0 0
    %1849 = vmatpush1.bf16.msra.mxu0 %v1637
    %1850 = vmatprep.subr.bf16.mxu0 0
    %1851 = vmatpush1.bf16.msra.mxu0 %v1640
    %1852 = vmatprep.subr.bf16.mxu0 0
    %1853 = vmatpush1.bf16.msra.mxu0 %v1643
    %1854 = vmatprep.subr.bf16.mxu0 0
    %1855 = vmatpush1.bf16.msra.mxu0 0
    %1856 = vmatprep.subr.bf16.mxu0 0
    %1857 = vmatpush1.bf16.msra.mxu0 0
    %1858 = vmatprep.subr.bf16.mxu0 0
    %1859 = vmatpush1.bf16.msra.mxu0 0
    %1860 = vmatprep.subr.bf16.mxu0 0
    %1861 = vmatpush1.bf16.msra.mxu0 0
    %1862 = vmatprep.subr.bf16.mxu0 0
    %1863 = vmatpush1.bf16.msra.mxu0 0
    %1864 = vmatprep.subr.bf16.mxu0 0
    %1865 = vmatpush1.bf16.msra.mxu0 0
    %1866 = vmatprep.subr.bf16.mxu0 0
    %1867 = vmatpush1.bf16.msra.mxu0 0
    %1868 = vmatprep.subr.bf16.mxu0 0
    %1869 = vmatpush1.bf16.msra.mxu0 0
    %1870 = vmatprep.mubr.bf16.mxu0 0
    %1871 = vmatmul.mubr.bf16.gmra.mrb[0].mxu0 %v782
    %v1872 = vpop.f32.mrb[0].mxu0
    %v1873 = vadd.f32 %v1833, %v1872
    %v1874 = vpop.f32.mrb[0].mxu0
    %v1875 = vpop.f32.mrb[0].mxu0
    %v1876 = vpop.f32.mrb[0].mxu0
    %1877 = vdwg.mxu0
    %v1878 = vld [vmem:[%s9] sm:$0x7]
    %v1880 = vlaneseq
    %v1881 = vshrl.u32 %v1880, 7
    %v1882 = vsub.s32 0, %v1881
    %v1883 = vrot.slane %v1878, %v1882
    %v1884 = vlaneseq
    %v1885 = vshrl.u32 %v1884, 7
    %v1886 = vsub.s32 1, %v1885
    %v1887 = vrot.slane %v1878, %v1886
    %v1888 = vlaneseq
    %v1889 = vshrl.u32 %v1888, 7
    %v1890 = vsub.s32 2, %v1889
    %v1891 = vrot.slane %v1878, %v1890
    %v1895 = vadd.f32 %v1792, %v1883
    %v1896 = vadd.f32 %v1794, %v1887
    %v1897 = vadd.f32 %v1873, %v1891
    %v1898 = vld [vmem:[%s10] sm:$0x7]
    %v1899 = vld [vmem:[%s11] sm:$0x7]
    %v1900 = vadd.f32 %v1895, %v1896
    %v1901 = vadd.f32 %v1900, %v1897
    %1902 = vadd.xlane.f32.xlu0 %v1901
    %v1903 = vpop.xlane.xlu0 %1902
    %v1904 = vmul.f32 %v1895, %v1895
    %v1905 = vmul.f32 %v1896, %v1896
    %v1906 = vmul.f32 %v1897, %v1897
    %v1907 = vadd.f32 %v1904, %v1905
    %v1908 = vadd.f32 %v1907, %v1906
    %1909 = vadd.xlane.f32.xlu0 %v1908
    %v1910 = vpop.xlane.xlu0 %1909
    %v1911 = vmul.f32 %v1903, 0.0026041667
    %v1912 = vmul.f32 %v1910, 0.0026041667
    %v1913 = vmul.f32 %v1911, %v1911
    %v1914 = vsub.f32 %v1912, %v1913
    %v1915 = vmax.f32 %v1914, 0.0
    %v1916 = vadd.f32 %v1915, 1e-05
    %v1917 = vrsqrt.pop %v1916
    %v1918 = vsub.f32 %v1895, %v1911
    %v1919 = vsub.f32 %v1896, %v1911
    %v1920 = vsub.f32 %v1897, %v1911
    %v1921 = vmul.f32 %v1918, %v1917
    %v1922 = vmul.f32 %v1919, %v1917
    %v1923 = vmul.f32 %v1920, %v1917
    %v1925 = vlaneseq
    %v1926 = vshrl.u32 %v1925, 7
    %v1927 = vsub.s32 0, %v1926
    %v1928 = vrot.slane %v1898, %v1927
    %v1929 = vlaneseq
    %v1930 = vshrl.u32 %v1929, 7
    %v1931 = vsub.s32 1, %v1930
    %v1932 = vrot.slane %v1898, %v1931
    %v1933 = vlaneseq
    %v1934 = vshrl.u32 %v1933, 7
    %v1935 = vsub.s32 2, %v1934
    %v1936 = vrot.slane %v1898, %v1935
    %v1940 = vmul.f32 %v1921, %v1928
    %v1941 = vmul.f32 %v1922, %v1932
    %v1942 = vmul.f32 %v1923, %v1936
    %v1944 = vlaneseq
    %v1945 = vshrl.u32 %v1944, 7
    %v1946 = vsub.s32 0, %v1945
    %v1947 = vrot.slane %v1899, %v1946
    %v1948 = vlaneseq
    %v1949 = vshrl.u32 %v1948, 7
    %v1950 = vsub.s32 1, %v1949
    %v1951 = vrot.slane %v1899, %v1950
    %v1952 = vlaneseq
    %v1953 = vshrl.u32 %v1952, 7
    %v1954 = vsub.s32 2, %v1953
    %v1955 = vrot.slane %v1899, %v1954
    %v1959 = vadd.f32 %v1940, %v1947
    %v1960 = vadd.f32 %v1941, %v1951
    %v1961 = vadd.f32 %v1942, %v1955
    %v1962 = vmax.f32 %v1959, 0.0
    %v1963 = vmax.f32 %v1960, 0.0
    %v1964 = vmax.f32 %v1961, 0.0
    %1965 = vst [vmem:[#allocation13] sm:$0xff] %v1962
    %1966 = vst [vmem:[#allocation13 + $0x8] sm:$0xff] %v1963
    %1967 = vst [vmem:[#allocation13 + $0x10] sm:$0xff] %v1964
    // Predicated region
    $region74: #{tpu_custom_call.1} parent=1 // pred_check
      _
    $region75: #{tpu_custom_call.1} parent=1 // pred_check_branch
      %1969 = sbr.rel (0) target = $region77
    $region76: #{tpu_custom_call.1} parent=1 // pred_region
      %s1971 = ssub.s32 384, 384
      %1972 = vsyncadd [#allocation4], %s1971
      %s1974 = sshll.u32 [#allocation13], 4
      %s1975 = int_to_ptr.vmem [resolvable:$true] %s1974
      %1977 = dma.vmem_to_hbm [thread:$0]  %s1975, 384, %s12, [#allocation4]
    $region77: #{tpu_custom_call.1} parent=1 // pred_fallthru
      _
    // Predicated region
    $region78: #{tpu_custom_call.1} parent=1 // pred_check
      _
    $region79: #{tpu_custom_call.1} parent=1 // pred_check_branch
      %1979 = sbr.rel (0) target = $region81
    $region80: #{tpu_custom_call.1} parent=1 // pred_region
      %1980 = dma.done [#allocation4], 384
    $region81: #{tpu_custom_call.1} parent=1 // pred_fallthru
      _
    %1981 = vsyncpa [#allocation3], 1
    %1982 = vsyncpa [#allocation6], 1
    %1983 = vsyncpa [#allocation9], 1
    %1984 = vsyncpa [#allocation12], 1
    %1985 = vsyncpa [#allocation4], 1

</llo_original>
